<compile_context>
chip_gen: v6e
topology: v6e:2x2x1
jax: 0.10.0
libtpu: 0.0.40
codegen_flags: <defaults>
</compile_context>

<pallas_src>
import functools

import jax
import jax.numpy as jnp
from jax import lax
from jax.experimental import pallas as pl
from jax.experimental.pallas import tpu as pltpu


# ----------------------------------------------------------------------------
# Fused Pallas kernel: all conv layers + pooling + MLP head in one launch
# ----------------------------------------------------------------------------

def fused_gcn_kernel(n_convs, *refs):
    """refs = [x, adj, pool, (w_l, b_l) * n_convs, wd, bd, wmu, bmu, o_ref]."""
    x_ref, adj_ref, pool_ref = refs[0], refs[1], refs[2]
    conv_refs = refs[3:3 + 2 * n_convs]
    wd_ref, bd_ref, wmu_ref, bmu_ref = refs[3 + 2 * n_convs:3 + 2 * n_convs + 4]
    o_ref = refs[-1]

    x = x_ref[...]                                    # (N, F0) f32
    # adjacency arrives as bf16 (exact for 0/1) -> upcast once; reused by all layers
    a = adj_ref[...].astype(jnp.float32)              # (N, N)

    # Unrolled layer loop: intermediates never leave VMEM/vregs.
    for l in range(n_convs):
        w = conv_refs[2 * l][...]                     # (2*Fin, Fout) = [[W_root],[W_rel]]
        b = conv_refs[2 * l + 1][...]                 # (1, Fout)
        agg = jnp.dot(a, x, preferred_element_type=jnp.float32)          # (N, Fin)
        xa = jnp.concatenate([x, agg], axis=-1)                          # (N, 2*Fin)
        h = jnp.dot(xa, w, preferred_element_type=jnp.float32) + b       # one MXU push
        x = jnp.maximum(h, 0.0)

    # global_mean_pool as a (B, N) pooling-matrix matmul
    pooled = jnp.dot(pool_ref[...], x, preferred_element_type=jnp.float32)   # (B, F)
    h = jnp.maximum(
        jnp.dot(pooled, wd_ref[...], preferred_element_type=jnp.float32) + bd_ref[...],
        0.0)                                                                  # (B, F)
    # fc_mu, written lane-dense as (1, B): (1,F) contracted with (B,F) on F
    mu = lax.dot_general(wmu_ref[...], h, (((1,), (1,)), ((), ())),
                         preferred_element_type=jnp.float32) + bmu_ref[...]   # (1, B)
    o_ref[...] = mu


_VMEM = pl.BlockSpec(memory_space=pltpu.MemorySpace.VMEM)


# ----------------------------------------------------------------------------
# Model: parameter construction + forward wrapper
# ----------------------------------------------------------------------------

NUM_NODE_FEATURES = 4

HP = {
    "use_batch_norm": False,  # BatchNorm branch disabled by hp
    "hidden_dim1": 8, "hidden_dim2": 8, "hidden_dim3": 16,
    "hidden_dim4": 16, "hidden_dim5": 32, "hidden_dim6": 32,
    "num_layers1": 1, "num_layers2": 1, "num_layers3": 1,
    "num_layers4": 1, "num_layers5": 1, "num_layers6": 1,
}


def init_params(key, hp, num_node_features):
    hidden_dims = [hp[f"hidden_dim{i + 1}"] for i in range(6)]
    num_layers = [hp[f"num_layers{i + 1}"] for i in range(6)]

    convs = []
    for i in range(len(hidden_dims)):
        for j in range(num_layers[i]):
            if i == 0 and j == 0:
                in_f = num_node_features
            elif j == 0:
                in_f = hidden_dims[i - 1]
            else:
                in_f = hidden_dims[i]
            out_f = hidden_dims[i]
            key, k1, k2, k3 = jax.random.split(key, 4)
            w_root = 0.2 * jax.random.normal(k1, (in_f, out_f), jnp.float32)
            w_rel = 0.2 * jax.random.normal(k2, (in_f, out_f), jnp.float32)
            convs.append(dict(
                # stacked so that [x | A@x] @ w == x @ w_root + (A@x) @ w_rel
                w=jnp.concatenate([w_root, w_rel], axis=0),        # (2*in_f, out_f)
                b=0.1 * jax.random.normal(k3, (1, out_f), jnp.float32),
            ))

    h_last = hidden_dims[-1]
    key, k1, k2, k3, k4 = jax.random.split(key, 5)
    head = dict(
        wd=0.2 * jax.random.normal(k1, (h_last, h_last), jnp.float32),
        bd=0.1 * jax.random.normal(k2, (1, h_last), jnp.float32),
        wmu=0.2 * jax.random.normal(k3, (1, h_last), jnp.float32),   # row vector
        bmu=0.1 * jax.random.normal(k4, (1, 1), jnp.float32),
    )
    return dict(convs=convs, head=head)


def gcn_forward(params, x, adj, pool):
    """x: (N, F0), adj: (N, N) dense A[dst, src], pool: (B, N) mean-pool matrix."""
    n = x.shape[0]
    n_pad = ((n + 127) // 128) * 128            # pad node dim to a multiple of 128
    if n_pad != n:
        pad = n_pad - n
        x = jnp.pad(x, ((0, pad), (0, 0)))
        adj = jnp.pad(adj, ((0, pad), (0, pad)))
        pool = jnp.pad(pool, ((0, 0), (0, pad)))
    adj_bf16 = adj.astype(jnp.bfloat16)         # 0/1 entries -> exact, half the HBM bytes

    args = [x, adj_bf16, pool]
    for layer in params["convs"]:
        args += [layer["w"], layer["b"]]
    head = params["head"]
    args += [head["wd"], head["bd"], head["wmu"], head["bmu"]]

    n_convs = len(params["convs"])
    num_graphs = pool.shape[0]

    out = pl.pallas_call(
        functools.partial(fused_gcn_kernel, n_convs),
        out_shape=jax.ShapeDtypeStruct((1, num_graphs), jnp.float32),
        in_specs=[_VMEM] * len(args),
        out_specs=_VMEM,
    )(*args)
    return out[0]                               # (B,) == fc_mu(x).squeeze(-1)


# ----------------------------------------------------------------------------
# Example graph construction (deterministic, built in-script)
# ----------------------------------------------------------------------------

def build_example(key, num_graphs=4, nodes_per_graph=8, num_features=NUM_NODE_FEATURES):
    n = num_graphs * nodes_per_graph
    x = jax.random.normal(key, (n, num_features), jnp.float32)

    # batch vector: node -> graph id
    batch = jnp.repeat(jnp.arange(num_graphs, dtype=jnp.int32), nodes_per_graph)

    # edge_index: bidirectional ring inside each graph
    src_list, dst_list = [], []
    for g in range(num_graphs):
        base = g * nodes_per_graph
        for k in range(nodes_per_graph):
            a = base + k
            b = base + (k + 1) % nodes_per_graph
            src_list += [a, b]
            dst_list += [b, a]
    src = jnp.asarray(src_list, jnp.int32)
    dst = jnp.asarray(dst_list, jnp.int32)

    # dense adjacency: A[dst, src] = 1.0 (message from src aggregated at dst)
    adj = jnp.zeros((n, n), jnp.float32).at[dst, src].add(1.0)

    # pooling matrix for global_mean_pool: pool[g, i] = 1/|V_g| if batch[i]==g
    onehot = (batch[None, :] == jnp.arange(num_graphs)[:, None]).astype(jnp.float32)
    counts = jnp.sum(onehot, axis=1, keepdims=True)
    pool = onehot / counts
    return x, adj, pool


if __name__ == "__main__":
    key = jax.random.PRNGKey(0)
    key_params, key_data = jax.random.split(key)

    params = init_params(key_params, HP, NUM_NODE_FEATURES)
    x, adj, pool = build_example(key_data, num_graphs=4, nodes_per_graph=8)

    fwd = jax.jit(functools.partial(gcn_forward, params))
    mu = fwd(x, adj, pool)
    jax.block_until_ready(mu)

    assert mu.shape == (4,), mu.shape
    print("KERNEL_OK")
</pallas_src>

<mosaic_0001>
module attributes {stable_mosaic.version = 11 : i64} {
  func.func @fused_gcn_kernel(%arg0: memref<128x4xf32, #tpu.memory_space<vmem>>, %arg1: memref<128x128xbf16, #tpu.memory_space<vmem>>, %arg2: memref<4x128xf32, #tpu.memory_space<vmem>>, %arg3: memref<8x8xf32, #tpu.memory_space<vmem>>, %arg4: memref<1x8xf32, #tpu.memory_space<vmem>>, %arg5: memref<16x8xf32, #tpu.memory_space<vmem>>, %arg6: memref<1x8xf32, #tpu.memory_space<vmem>>, %arg7: memref<16x16xf32, #tpu.memory_space<vmem>>, %arg8: memref<1x16xf32, #tpu.memory_space<vmem>>, %arg9: memref<32x16xf32, #tpu.memory_space<vmem>>, %arg10: memref<1x16xf32, #tpu.memory_space<vmem>>, %arg11: memref<32x32xf32, #tpu.memory_space<vmem>>, %arg12: memref<1x32xf32, #tpu.memory_space<vmem>>, %arg13: memref<64x32xf32, #tpu.memory_space<vmem>>, %arg14: memref<1x32xf32, #tpu.memory_space<vmem>>, %arg15: memref<32x32xf32, #tpu.memory_space<vmem>>, %arg16: memref<1x32xf32, #tpu.memory_space<vmem>>, %arg17: memref<1x32xf32, #tpu.memory_space<vmem>>, %arg18: memref<1x1xf32, #tpu.memory_space<vmem>>, %arg19: memref<1x4xf32, #tpu.memory_space<vmem>>) attributes {dimension_semantics = [], scalar_prefetch = 0 : i64, scratch_operands = 0 : i64, tpu.core_type = #tpu.core_type<tc>} {
    %c0 = arith.constant 0 : index
    %c0_0 = arith.constant 0 : index
    %0 = vector.load %arg0[%c0, %c0_0] : memref<128x4xf32, #tpu.memory_space<vmem>>, vector<128x4xf32>
    %c0_1 = arith.constant 0 : index
    %c0_2 = arith.constant 0 : index
    %1 = vector.load %arg1[%c0_1, %c0_2] : memref<128x128xbf16, #tpu.memory_space<vmem>>, vector<128x128xbf16>
    %2 = arith.extf %1 : vector<128x128xbf16> to vector<128x128xf32>
    %c0_3 = arith.constant 0 : index
    %c0_4 = arith.constant 0 : index
    %3 = vector.load %arg3[%c0_3, %c0_4] : memref<8x8xf32, #tpu.memory_space<vmem>>, vector<8x8xf32>
    %c0_5 = arith.constant 0 : index
    %c0_6 = arith.constant 0 : index
    %4 = vector.load %arg4[%c0_5, %c0_6] : memref<1x8xf32, #tpu.memory_space<vmem>>, vector<1x8xf32>
    %cst = arith.constant dense<0.000000e+00> : vector<128x4xf32>
    %5 = tpu.matmul %2, %0, %cst {dimension_numbers = #tpu.dot_dimension_numbers<[1], [0], [0], [1], [0, 0, 1, 1], [], []>} : vector<128x128xf32>, vector<128x4xf32>, vector<128x4xf32> -> vector<128x4xf32>
    %6 = tpu.concatenate %0, %5 in 1 : vector<128x4xf32>, vector<128x4xf32> -> vector<128x8xf32>
    %cst_7 = arith.constant dense<0.000000e+00> : vector<128x8xf32>
    %7 = tpu.matmul %6, %3, %cst_7 {dimension_numbers = #tpu.dot_dimension_numbers<[1], [0], [0], [1], [0, 0, 1, 1], [], []>} : vector<128x8xf32>, vector<8x8xf32>, vector<128x8xf32> -> vector<128x8xf32>
    %8 = vector.broadcast %4 : vector<1x8xf32> to vector<128x8xf32>
    %9 = arith.addf %7, %8 : vector<128x8xf32>
    %cst_8 = arith.constant 0.000000e+00 : f32
    %10 = vector.broadcast %cst_8 : f32 to vector<128x8xf32>
    %11 = arith.maximumf %9, %10 : vector<128x8xf32>
    %c0_9 = arith.constant 0 : index
    %c0_10 = arith.constant 0 : index
    %12 = vector.load %arg5[%c0_9, %c0_10] : memref<16x8xf32, #tpu.memory_space<vmem>>, vector<16x8xf32>
    %c0_11 = arith.constant 0 : index
    %c0_12 = arith.constant 0 : index
    %13 = vector.load %arg6[%c0_11, %c0_12] : memref<1x8xf32, #tpu.memory_space<vmem>>, vector<1x8xf32>
    %cst_13 = arith.constant dense<0.000000e+00> : vector<128x8xf32>
    %14 = tpu.matmul %2, %11, %cst_13 {dimension_numbers = #tpu.dot_dimension_numbers<[1], [0], [0], [1], [0, 0, 1, 1], [], []>} : vector<128x128xf32>, vector<128x8xf32>, vector<128x8xf32> -> vector<128x8xf32>
    %15 = tpu.concatenate %11, %14 in 1 : vector<128x8xf32>, vector<128x8xf32> -> vector<128x16xf32>
    %cst_14 = arith.constant dense<0.000000e+00> : vector<128x8xf32>
    %16 = tpu.matmul %15, %12, %cst_14 {dimension_numbers = #tpu.dot_dimension_numbers<[1], [0], [0], [1], [0, 0, 1, 1], [], []>} : vector<128x16xf32>, vector<16x8xf32>, vector<128x8xf32> -> vector<128x8xf32>
    %17 = vector.broadcast %13 : vector<1x8xf32> to vector<128x8xf32>
    %18 = arith.addf %16, %17 : vector<128x8xf32>
    %cst_15 = arith.constant 0.000000e+00 : f32
    %19 = vector.broadcast %cst_15 : f32 to vector<128x8xf32>
    %20 = arith.maximumf %18, %19 : vector<128x8xf32>
    %c0_16 = arith.constant 0 : index
    %c0_17 = arith.constant 0 : index
    %21 = vector.load %arg7[%c0_16, %c0_17] : memref<16x16xf32, #tpu.memory_space<vmem>>, vector<16x16xf32>
    %c0_18 = arith.constant 0 : index
    %c0_19 = arith.constant 0 : index
    %22 = vector.load %arg8[%c0_18, %c0_19] : memref<1x16xf32, #tpu.memory_space<vmem>>, vector<1x16xf32>
    %cst_20 = arith.constant dense<0.000000e+00> : vector<128x8xf32>
    %23 = tpu.matmul %2, %20, %cst_20 {dimension_numbers = #tpu.dot_dimension_numbers<[1], [0], [0], [1], [0, 0, 1, 1], [], []>} : vector<128x128xf32>, vector<128x8xf32>, vector<128x8xf32> -> vector<128x8xf32>
    %24 = tpu.concatenate %20, %23 in 1 : vector<128x8xf32>, vector<128x8xf32> -> vector<128x16xf32>
    %cst_21 = arith.constant dense<0.000000e+00> : vector<128x16xf32>
    %25 = tpu.matmul %24, %21, %cst_21 {dimension_numbers = #tpu.dot_dimension_numbers<[1], [0], [0], [1], [0, 0, 1, 1], [], []>} : vector<128x16xf32>, vector<16x16xf32>, vector<128x16xf32> -> vector<128x16xf32>
    %26 = vector.broadcast %22 : vector<1x16xf32> to vector<128x16xf32>
    %27 = arith.addf %25, %26 : vector<128x16xf32>
    %cst_22 = arith.constant 0.000000e+00 : f32
    %28 = vector.broadcast %cst_22 : f32 to vector<128x16xf32>
    %29 = arith.maximumf %27, %28 : vector<128x16xf32>
    %c0_23 = arith.constant 0 : index
    %c0_24 = arith.constant 0 : index
    %30 = vector.load %arg9[%c0_23, %c0_24] : memref<32x16xf32, #tpu.memory_space<vmem>>, vector<32x16xf32>
    %c0_25 = arith.constant 0 : index
    %c0_26 = arith.constant 0 : index
    %31 = vector.load %arg10[%c0_25, %c0_26] : memref<1x16xf32, #tpu.memory_space<vmem>>, vector<1x16xf32>
    %cst_27 = arith.constant dense<0.000000e+00> : vector<128x16xf32>
    %32 = tpu.matmul %2, %29, %cst_27 {dimension_numbers = #tpu.dot_dimension_numbers<[1], [0], [0], [1], [0, 0, 1, 1], [], []>} : vector<128x128xf32>, vector<128x16xf32>, vector<128x16xf32> -> vector<128x16xf32>
    %33 = tpu.concatenate %29, %32 in 1 : vector<128x16xf32>, vector<128x16xf32> -> vector<128x32xf32>
    %cst_28 = arith.constant dense<0.000000e+00> : vector<128x16xf32>
    %34 = tpu.matmul %33, %30, %cst_28 {dimension_numbers = #tpu.dot_dimension_numbers<[1], [0], [0], [1], [0, 0, 1, 1], [], []>} : vector<128x32xf32>, vector<32x16xf32>, vector<128x16xf32> -> vector<128x16xf32>
    %35 = vector.broadcast %31 : vector<1x16xf32> to vector<128x16xf32>
    %36 = arith.addf %34, %35 : vector<128x16xf32>
    %cst_29 = arith.constant 0.000000e+00 : f32
    %37 = vector.broadcast %cst_29 : f32 to vector<128x16xf32>
    %38 = arith.maximumf %36, %37 : vector<128x16xf32>
    %c0_30 = arith.constant 0 : index
    %c0_31 = arith.constant 0 : index
    %39 = vector.load %arg11[%c0_30, %c0_31] : memref<32x32xf32, #tpu.memory_space<vmem>>, vector<32x32xf32>
    %c0_32 = arith.constant 0 : index
    %c0_33 = arith.constant 0 : index
    %40 = vector.load %arg12[%c0_32, %c0_33] : memref<1x32xf32, #tpu.memory_space<vmem>>, vector<1x32xf32>
    %cst_34 = arith.constant dense<0.000000e+00> : vector<128x16xf32>
    %41 = tpu.matmul %2, %38, %cst_34 {dimension_numbers = #tpu.dot_dimension_numbers<[1], [0], [0], [1], [0, 0, 1, 1], [], []>} : vector<128x128xf32>, vector<128x16xf32>, vector<128x16xf32> -> vector<128x16xf32>
    %42 = tpu.concatenate %38, %41 in 1 : vector<128x16xf32>, vector<128x16xf32> -> vector<128x32xf32>
    %cst_35 = arith.constant dense<0.000000e+00> : vector<128x32xf32>
    %43 = tpu.matmul %42, %39, %cst_35 {dimension_numbers = #tpu.dot_dimension_numbers<[1], [0], [0], [1], [0, 0, 1, 1], [], []>} : vector<128x32xf32>, vector<32x32xf32>, vector<128x32xf32> -> vector<128x32xf32>
    %44 = vector.broadcast %40 : vector<1x32xf32> to vector<128x32xf32>
    %45 = arith.addf %43, %44 : vector<128x32xf32>
    %cst_36 = arith.constant 0.000000e+00 : f32
    %46 = vector.broadcast %cst_36 : f32 to vector<128x32xf32>
    %47 = arith.maximumf %45, %46 : vector<128x32xf32>
    %c0_37 = arith.constant 0 : index
    %c0_38 = arith.constant 0 : index
    %48 = vector.load %arg13[%c0_37, %c0_38] : memref<64x32xf32, #tpu.memory_space<vmem>>, vector<64x32xf32>
    %c0_39 = arith.constant 0 : index
    %c0_40 = arith.constant 0 : index
    %49 = vector.load %arg14[%c0_39, %c0_40] : memref<1x32xf32, #tpu.memory_space<vmem>>, vector<1x32xf32>
    %cst_41 = arith.constant dense<0.000000e+00> : vector<128x32xf32>
    %50 = tpu.matmul %2, %47, %cst_41 {dimension_numbers = #tpu.dot_dimension_numbers<[1], [0], [0], [1], [0, 0, 1, 1], [], []>} : vector<128x128xf32>, vector<128x32xf32>, vector<128x32xf32> -> vector<128x32xf32>
    %51 = tpu.concatenate %47, %50 in 1 : vector<128x32xf32>, vector<128x32xf32> -> vector<128x64xf32>
    %cst_42 = arith.constant dense<0.000000e+00> : vector<128x32xf32>
    %52 = tpu.matmul %51, %48, %cst_42 {dimension_numbers = #tpu.dot_dimension_numbers<[1], [0], [0], [1], [0, 0, 1, 1], [], []>} : vector<128x64xf32>, vector<64x32xf32>, vector<128x32xf32> -> vector<128x32xf32>
    %53 = vector.broadcast %49 : vector<1x32xf32> to vector<128x32xf32>
    %54 = arith.addf %52, %53 : vector<128x32xf32>
    %cst_43 = arith.constant 0.000000e+00 : f32
    %55 = vector.broadcast %cst_43 : f32 to vector<128x32xf32>
    %56 = arith.maximumf %54, %55 : vector<128x32xf32>
    %c0_44 = arith.constant 0 : index
    %c0_45 = arith.constant 0 : index
    %57 = vector.load %arg2[%c0_44, %c0_45] : memref<4x128xf32, #tpu.memory_space<vmem>>, vector<4x128xf32>
    %cst_46 = arith.constant dense<0.000000e+00> : vector<4x32xf32>
    %58 = tpu.matmul %57, %56, %cst_46 {dimension_numbers = #tpu.dot_dimension_numbers<[1], [0], [0], [1], [0, 0, 1, 1], [], []>} : vector<4x128xf32>, vector<128x32xf32>, vector<4x32xf32> -> vector<4x32xf32>
    %c0_47 = arith.constant 0 : index
    %c0_48 = arith.constant 0 : index
    %59 = vector.load %arg15[%c0_47, %c0_48] : memref<32x32xf32, #tpu.memory_space<vmem>>, vector<32x32xf32>
    %cst_49 = arith.constant dense<0.000000e+00> : vector<4x32xf32>
    %60 = tpu.matmul %58, %59, %cst_49 {dimension_numbers = #tpu.dot_dimension_numbers<[1], [0], [0], [1], [0, 0, 1, 1], [], []>} : vector<4x32xf32>, vector<32x32xf32>, vector<4x32xf32> -> vector<4x32xf32>
    %c0_50 = arith.constant 0 : index
    %c0_51 = arith.constant 0 : index
    %61 = vector.load %arg16[%c0_50, %c0_51] : memref<1x32xf32, #tpu.memory_space<vmem>>, vector<1x32xf32>
    %62 = vector.broadcast %61 : vector<1x32xf32> to vector<4x32xf32>
    %63 = arith.addf %60, %62 : vector<4x32xf32>
    %cst_52 = arith.constant 0.000000e+00 : f32
    %64 = vector.broadcast %cst_52 : f32 to vector<4x32xf32>
    %65 = arith.maximumf %63, %64 : vector<4x32xf32>
    %c0_53 = arith.constant 0 : index
    %c0_54 = arith.constant 0 : index
    %66 = vector.load %arg17[%c0_53, %c0_54] : memref<1x32xf32, #tpu.memory_space<vmem>>, vector<1x32xf32>
    %cst_55 = arith.constant dense<0.000000e+00> : vector<1x4xf32>
    %67 = tpu.matmul %66, %65, %cst_55 {dimension_numbers = #tpu.dot_dimension_numbers<[1], [1], [0], [0], [0, 0, 1, 0], [], []>} : vector<1x32xf32>, vector<4x32xf32>, vector<1x4xf32> -> vector<1x4xf32>
    %c0_56 = arith.constant 0 : index
    %c0_57 = arith.constant 0 : index
    %68 = vector.load %arg18[%c0_56, %c0_57] : memref<1x1xf32, #tpu.memory_space<vmem>>, vector<1x1xf32>
    %69 = vector.broadcast %68 : vector<1x1xf32> to vector<1x4xf32>
    %70 = arith.addf %67, %69 : vector<1x4xf32>
    %c0_58 = arith.constant 0 : index
    %c0_59 = arith.constant 0 : index
    %71 = vector.load %arg19[%c0_58, %c0_59] : memref<1x4xf32, #tpu.memory_space<vmem>>, vector<1x4xf32>
    tpu.vector_store %arg19[%c0_58, %c0_59], %70 {strides = array<i32>} : memref<1x4xf32, #tpu.memory_space<vmem>>, vector<1x4xf32>,
    return
  }
}

</mosaic_0001>

<llo_original>
// kernel: gcn_forward.1
$region0: #{gcn_forward.1}
  #allocation0 [shape = 'u32[]', space=smem, size = 0x4, offset = 0x4, fixed_abs, tag = 'smem constant byte address 0x4 - core index']
  #allocation1 [shape = 'u32[144,128]{1,0:T(1,128)}', space=vmem, size = 0x12000, scoped, tag = 'internal scratch']
  #allocation2 [shape = 'f32[1,1]{1,0:T(1,128)S(1)}', space=vmem, size = 0x200, scoped, tag = 'scoped memory for gcn_forward.1']
  %s0 = inlined_call_operand.vmem [shape: f32[128,4], index: 0, kind: input, shape index: {}]
  %s1 = inlined_call_operand.vmem [shape: bf16[128,128], index: 1, kind: input, shape index: {}]
  %s2 = inlined_call_operand.vmem [shape: f32[4,128], index: 2, kind: input, shape index: {}]
  %s3 = inlined_call_operand.vmem [shape: f32[8,8], index: 3, kind: input, shape index: {}]
  %s4 = inlined_call_operand.vmem [shape: f32[1,8], index: 4, kind: input, shape index: {}]
  %s5 = inlined_call_operand.vmem [shape: f32[16,8], index: 5, kind: input, shape index: {}]
  %s6 = inlined_call_operand.vmem [shape: f32[1,8], index: 6, kind: input, shape index: {}]
  %s7 = inlined_call_operand.vmem [shape: f32[16,16], index: 7, kind: input, shape index: {}]
  %s8 = inlined_call_operand.vmem [shape: f32[1,16], index: 8, kind: input, shape index: {}]
  %s9 = inlined_call_operand.vmem [shape: f32[32,16], index: 9, kind: input, shape index: {}]
  %s10 = inlined_call_operand.vmem [shape: f32[1,16], index: 10, kind: input, shape index: {}]
  %s11 = inlined_call_operand.vmem [shape: f32[32,32], index: 11, kind: input, shape index: {}]
  %s12 = inlined_call_operand.vmem [shape: f32[1,32], index: 12, kind: input, shape index: {}]
  %s13 = inlined_call_operand.vmem [shape: f32[64,32], index: 13, kind: input, shape index: {}]
  %s14 = inlined_call_operand.vmem [shape: f32[1,32], index: 14, kind: input, shape index: {}]
  %s15 = inlined_call_operand.vmem [shape: f32[32,32], index: 15, kind: input, shape index: {}]
  %s16 = inlined_call_operand.vmem [shape: f32[1,32], index: 16, kind: input, shape index: {}]
  %s17 = inlined_call_operand.vmem [shape: f32[1,32], index: 17, kind: input, shape index: {}]
  %s18 = inlined_call_operand.<no memory space> [shape: f32[1,1], index: 18, kind: input, shape index: {}]
  %s19 = inlined_call_operand.hbm [shape: f32[1,4], index: 19, kind: output, shape index: {}]
  %s20 = sld [smem:[#allocation0]]
  $region86: #{gcn_forward.1} parent=0
    _
  %s22 = ssub.s32 1, %s20
  %s23 = scalar_select 0, %s22, %s20
  %v24 = vstv %s18
  %25 = vst [vmem:[#allocation2] sm:$0x1] %v24
  $region1: #{gcn_forward.1} parent=0
    #allocation3 [shape = 'u8[512]{0}', space=vmem, size = 0x400, scoped, tag = 'output window, operand 0, single buffered']
    #allocation4 [shape = 's32[1]{0}', space=sflag, size = 0x4, scoped, tag = 'scoped memory for gcn_forward.1']
    %26 = vsyncpa [#allocation4], 0
    // Predicated region
    $region2: #{gcn_forward.1} parent=1 // pred_check
      _
    $region3: #{gcn_forward.1} parent=1 // pred_check_branch
      %28 = sbr.rel (0) target = $region5
    $region4: #{gcn_forward.1} parent=1 // pred_region
      _
    $region5: #{gcn_forward.1} parent=1 // pred_fallthru
      _
    // Predicated region
    $region6: #{gcn_forward.1} parent=1 // pred_check
      _
    $region7: #{gcn_forward.1} parent=1 // pred_check_branch
      %30 = sbr.rel (0) target = $region9
    $region8: #{gcn_forward.1} parent=1 // pred_region
      _
    $region9: #{gcn_forward.1} parent=1 // pred_fallthru
      _
    // Predicated region
    $region10: #{gcn_forward.1} parent=1 // pred_check
      _
    $region11: #{gcn_forward.1} parent=1 // pred_check_branch
      %32 = sbr.rel (0) target = $region13
    $region12: #{gcn_forward.1} parent=1 // pred_region
      _
    $region13: #{gcn_forward.1} parent=1 // pred_fallthru
      _
    // Predicated region
    $region14: #{gcn_forward.1} parent=1 // pred_check
      _
    $region15: #{gcn_forward.1} parent=1 // pred_check_branch
      %34 = sbr.rel (0) target = $region17
    $region16: #{gcn_forward.1} parent=1 // pred_region
      _
    $region17: #{gcn_forward.1} parent=1 // pred_fallthru
      _
    // Predicated region
    $region18: #{gcn_forward.1} parent=1 // pred_check
      _
    $region19: #{gcn_forward.1} parent=1 // pred_check_branch
      %36 = sbr.rel (0) target = $region21
    $region20: #{gcn_forward.1} parent=1 // pred_region
      _
    $region21: #{gcn_forward.1} parent=1 // pred_fallthru
      _
    // Predicated region
    $region22: #{gcn_forward.1} parent=1 // pred_check
      _
    $region23: #{gcn_forward.1} parent=1 // pred_check_branch
      %38 = sbr.rel (0) target = $region25
    $region24: #{gcn_forward.1} parent=1 // pred_region
      _
    $region25: #{gcn_forward.1} parent=1 // pred_fallthru
      _
    // Predicated region
    $region26: #{gcn_forward.1} parent=1 // pred_check
      _
    $region27: #{gcn_forward.1} parent=1 // pred_check_branch
      %40 = sbr.rel (0) target = $region29
    $region28: #{gcn_forward.1} parent=1 // pred_region
      _
    $region29: #{gcn_forward.1} parent=1 // pred_fallthru
      _
    // Predicated region
    $region30: #{gcn_forward.1} parent=1 // pred_check
      _
    $region31: #{gcn_forward.1} parent=1 // pred_check_branch
      %42 = sbr.rel (0) target = $region33
    $region32: #{gcn_forward.1} parent=1 // pred_region
      _
    $region33: #{gcn_forward.1} parent=1 // pred_fallthru
      _
    // Predicated region
    $region34: #{gcn_forward.1} parent=1 // pred_check
      _
    $region35: #{gcn_forward.1} parent=1 // pred_check_branch
      %44 = sbr.rel (0) target = $region37
    $region36: #{gcn_forward.1} parent=1 // pred_region
      _
    $region37: #{gcn_forward.1} parent=1 // pred_fallthru
      _
    // Predicated region
    $region38: #{gcn_forward.1} parent=1 // pred_check
      _
    $region39: #{gcn_forward.1} parent=1 // pred_check_branch
      %46 = sbr.rel (0) target = $region41
    $region40: #{gcn_forward.1} parent=1 // pred_region
      _
    $region41: #{gcn_forward.1} parent=1 // pred_fallthru
      _
    // Predicated region
    $region42: #{gcn_forward.1} parent=1 // pred_check
      _
    $region43: #{gcn_forward.1} parent=1 // pred_check_branch
      %48 = sbr.rel (0) target = $region45
    $region44: #{gcn_forward.1} parent=1 // pred_region
      _
    $region45: #{gcn_forward.1} parent=1 // pred_fallthru
      _
    // Predicated region
    $region46: #{gcn_forward.1} parent=1 // pred_check
      _
    $region47: #{gcn_forward.1} parent=1 // pred_check_branch
      %50 = sbr.rel (0) target = $region49
    $region48: #{gcn_forward.1} parent=1 // pred_region
      _
    $region49: #{gcn_forward.1} parent=1 // pred_fallthru
      _
    // Predicated region
    $region50: #{gcn_forward.1} parent=1 // pred_check
      _
    $region51: #{gcn_forward.1} parent=1 // pred_check_branch
      %52 = sbr.rel (0) target = $region53
    $region52: #{gcn_forward.1} parent=1 // pred_region
      _
    $region53: #{gcn_forward.1} parent=1 // pred_fallthru
      _
    // Predicated region
    $region54: #{gcn_forward.1} parent=1 // pred_check
      _
    $region55: #{gcn_forward.1} parent=1 // pred_check_branch
      %54 = sbr.rel (0) target = $region57
    $region56: #{gcn_forward.1} parent=1 // pred_region
      _
    $region57: #{gcn_forward.1} parent=1 // pred_fallthru
      _
    // Predicated region
    $region58: #{gcn_forward.1} parent=1 // pred_check
      _
    $region59: #{gcn_forward.1} parent=1 // pred_check_branch
      %56 = sbr.rel (0) target = $region61
    $region60: #{gcn_forward.1} parent=1 // pred_region
      _
    $region61: #{gcn_forward.1} parent=1 // pred_fallthru
      _
    // Predicated region
    $region62: #{gcn_forward.1} parent=1 // pred_check
      _
    $region63: #{gcn_forward.1} parent=1 // pred_check_branch
      %58 = sbr.rel (0) target = $region65
    $region64: #{gcn_forward.1} parent=1 // pred_region
      _
    $region65: #{gcn_forward.1} parent=1 // pred_fallthru
      _
    // Predicated region
    $region66: #{gcn_forward.1} parent=1 // pred_check
      _
    $region67: #{gcn_forward.1} parent=1 // pred_check_branch
      %60 = sbr.rel (0) target = $region69
    $region68: #{gcn_forward.1} parent=1 // pred_region
      _
    $region69: #{gcn_forward.1} parent=1 // pred_fallthru
      _
    // Predicated region
    $region70: #{gcn_forward.1} parent=1 // pred_check
      _
    $region71: #{gcn_forward.1} parent=1 // pred_check_branch
      %62 = sbr.rel (0) target = $region73
    $region72: #{gcn_forward.1} parent=1 // pred_region
      _
    $region73: #{gcn_forward.1} parent=1 // pred_fallthru
      _
    // Predicated region
    $region74: #{gcn_forward.1} parent=1 // pred_check
      _
    $region75: #{gcn_forward.1} parent=1 // pred_check_branch
      %64 = sbr.rel (0) target = $region77
    $region76: #{gcn_forward.1} parent=1 // pred_region
      _
    $region77: #{gcn_forward.1} parent=1 // pred_fallthru
      _
    %v65 = vld [vmem:[%s0] sm:$0xff]
    %v66 = vld [vmem:[%s0 + $0x8] sm:$0xff]
    %v67 = vld [vmem:[%s0 + $0x10] sm:$0xff]
    %v68 = vld [vmem:[%s0 + $0x18] sm:$0xff]
    %v69 = vld [vmem:[%s0 + $0x20] sm:$0xff]
    %v70 = vld [vmem:[%s0 + $0x28] sm:$0xff]
    %v71 = vld [vmem:[%s0 + $0x30] sm:$0xff]
    %v72 = vld [vmem:[%s0 + $0x38] sm:$0xff]
    %v73 = vld [vmem:[%s0 + $0x40] sm:$0xff]
    %v74 = vld [vmem:[%s0 + $0x48] sm:$0xff]
    %v75 = vld [vmem:[%s0 + $0x50] sm:$0xff]
    %v76 = vld [vmem:[%s0 + $0x58] sm:$0xff]
    %v77 = vld [vmem:[%s0 + $0x60] sm:$0xff]
    %v78 = vld [vmem:[%s0 + $0x68] sm:$0xff]
    %v79 = vld [vmem:[%s0 + $0x70] sm:$0xff]
    %v80 = vld [vmem:[%s0 + $0x78] sm:$0xff]
    %v81 = vld [vmem:[%s1] sm:$0xf]
    %v82 = vld [vmem:[%s1 + $0x4] sm:$0xf]
    %v83 = vld [vmem:[%s1 + $0x8] sm:$0xf]
    %v84 = vld [vmem:[%s1 + $0xc] sm:$0xf]
    %v85 = vld [vmem:[%s1 + $0x10] sm:$0xf]
    %v86 = vld [vmem:[%s1 + $0x14] sm:$0xf]
    %v87 = vld [vmem:[%s1 + $0x18] sm:$0xf]
    %v88 = vld [vmem:[%s1 + $0x1c] sm:$0xf]
    %v89 = vld [vmem:[%s1 + $0x20] sm:$0xf]
    %v90 = vld [vmem:[%s1 + $0x24] sm:$0xf]
    %v91 = vld [vmem:[%s1 + $0x28] sm:$0xf]
    %v92 = vld [vmem:[%s1 + $0x2c] sm:$0xf]
    %v93 = vld [vmem:[%s1 + $0x30] sm:$0xf]
    %v94 = vld [vmem:[%s1 + $0x34] sm:$0xf]
    %v95 = vld [vmem:[%s1 + $0x38] sm:$0xf]
    %v96 = vld [vmem:[%s1 + $0x3c] sm:$0xf]
    %v97 = vunpack.c.l.bf16 %v81
    %v98 = vunpack.c.l.bf16 %v82
    %v99 = vunpack.c.l.bf16 %v83
    %v100 = vunpack.c.l.bf16 %v84
    %v101 = vunpack.c.l.bf16 %v85
    %v102 = vunpack.c.l.bf16 %v86
    %v103 = vunpack.c.l.bf16 %v87
    %v104 = vunpack.c.l.bf16 %v88
    %v105 = vunpack.c.l.bf16 %v89
    %v106 = vunpack.c.l.bf16 %v90
    %v107 = vunpack.c.l.bf16 %v91
    %v108 = vunpack.c.l.bf16 %v92
    %v109 = vunpack.c.l.bf16 %v93
    %v110 = vunpack.c.l.bf16 %v94
    %v111 = vunpack.c.l.bf16 %v95
    %v112 = vunpack.c.l.bf16 %v96
    %v113 = vld [vmem:[%s3] sm:$0xff]
    %v114 = vld [vmem:[%s4] sm:$0x1]
    %115 = vmatprep.subr.mxu0 0.0
    %116 = vmatpush1.msra.mxu0 %v80
    %117 = vmatprep.subr.mxu0 0.0
    %118 = vmatpush1.msra.mxu0 %v79
    %119 = vmatprep.subr.mxu0 0.0
    %120 = vmatpush1.msra.mxu0 %v78
    %121 = vmatprep.subr.mxu0 0.0
    %122 = vmatpush1.msra.mxu0 %v77
    %123 = vmatprep.subr.mxu0 0.0
    %124 = vmatpush1.msra.mxu0 %v76
    %125 = vmatprep.subr.mxu0 0.0
    %126 = vmatpush1.msra.mxu0 %v75
    %127 = vmatprep.subr.mxu0 0.0
    %128 = vmatpush1.msra.mxu0 %v74
    %129 = vmatprep.subr.mxu0 0.0
    %130 = vmatpush1.msra.mxu0 %v73
    %131 = vmatprep.subr.mxu0 0.0
    %132 = vmatpush1.msra.mxu0 %v72
    %133 = vmatprep.subr.mxu0 0.0
    %134 = vmatpush1.msra.mxu0 %v71
    %135 = vmatprep.subr.mxu0 0.0
    %136 = vmatpush1.msra.mxu0 %v70
    %137 = vmatprep.subr.mxu0 0.0
    %138 = vmatpush1.msra.mxu0 %v69
    %139 = vmatprep.subr.mxu0 0.0
    %140 = vmatpush1.msra.mxu0 %v68
    %141 = vmatprep.subr.mxu0 0.0
    %142 = vmatpush1.msra.mxu0 %v67
    %143 = vmatprep.subr.mxu0 0.0
    %144 = vmatpush1.msra.mxu0 %v66
    %145 = vmatprep.subr.mxu0 0.0
    %146 = vmatpush1.msra.mxu0 %v65
    %147 = vmatprep.subr.mxu0 0.0
    %148 = vmatpush2.msra.mxu0 0.0
    %149 = vmatprep.subr.mxu0 0.0
    %150 = vmatpush2.msra.mxu0 0.0
    %151 = vmatprep.subr.mxu0 0.0
    %152 = vmatpush2.msra.mxu0 0.0
    %153 = vmatprep.subr.mxu0 0.0
    %154 = vmatpush2.msra.mxu0 0.0
    %155 = vmatprep.subr.mxu0 0.0
    %156 = vmatpush2.msra.mxu0 0.0
    %157 = vmatprep.subr.mxu0 0.0
    %158 = vmatpush2.msra.mxu0 0.0
    %159 = vmatprep.subr.mxu0 0.0
    %160 = vmatpush2.msra.mxu0 0.0
    %161 = vmatprep.subr.mxu0 0.0
    %162 = vmatpush2.msra.mxu0 0.0
    %163 = vmatprep.subr.mxu0 0.0
    %164 = vmatpush2.msra.mxu0 0.0
    %165 = vmatprep.subr.mxu0 0.0
    %166 = vmatpush2.msra.mxu0 0.0
    %167 = vmatprep.subr.mxu0 0.0
    %168 = vmatpush2.msra.mxu0 0.0
    %169 = vmatprep.subr.mxu0 0.0
    %170 = vmatpush2.msra.mxu0 0.0
    %171 = vmatprep.subr.mxu0 0.0
    %172 = vmatpush2.msra.mxu0 0.0
    %173 = vmatprep.subr.mxu0 0.0
    %174 = vmatpush2.msra.mxu0 0.0
    %175 = vmatprep.subr.mxu0 0.0
    %176 = vmatpush2.msra.mxu0 0.0
    %177 = vmatprep.subr.mxu0 0.0
    %178 = vmatpush2.msra.mxu0 0.0
    %179 = vmatprep.mubr.f32.mxu0 0.0
    %180 = vmatmul.mubr.f32.gmra.mxu0 %v97
    %v181 = vpop.f32.mrf.mxu0
    %v182 = vadd.f32 0.0, %v181
    %v183 = vpop.f32.mrf.mxu0
    %184 = vmatprep.mubr.f32.mxu0 0.0
    %185 = vmatmul.mubr.f32.gmra.mxu0 %v98
    %v186 = vpop.f32.mrf.mxu0
    %v187 = vadd.f32 0.0, %v186
    %v188 = vpop.f32.mrf.mxu0
    %189 = vmatprep.mubr.f32.mxu0 0.0
    %190 = vmatmul.mubr.f32.gmra.mxu0 %v99
    %v191 = vpop.f32.mrf.mxu0
    %v192 = vadd.f32 0.0, %v191
    %v193 = vpop.f32.mrf.mxu0
    %194 = vmatprep.mubr.f32.mxu0 0.0
    %195 = vmatmul.mubr.f32.gmra.mxu0 %v100
    %v196 = vpop.f32.mrf.mxu0
    %v197 = vadd.f32 0.0, %v196
    %v198 = vpop.f32.mrf.mxu0
    %199 = vmatprep.mubr.f32.mxu0 0.0
    %200 = vmatmul.mubr.f32.gmra.mxu0 %v101
    %v201 = vpop.f32.mrf.mxu0
    %v202 = vadd.f32 0.0, %v201
    %v203 = vpop.f32.mrf.mxu0
    %204 = vmatprep.mubr.f32.mxu0 0.0
    %205 = vmatmul.mubr.f32.gmra.mxu0 %v102
    %v206 = vpop.f32.mrf.mxu0
    %v207 = vadd.f32 0.0, %v206
    %v208 = vpop.f32.mrf.mxu0
    %209 = vmatprep.mubr.f32.mxu0 0.0
    %210 = vmatmul.mubr.f32.gmra.mxu0 %v103
    %v211 = vpop.f32.mrf.mxu0
    %v212 = vadd.f32 0.0, %v211
    %v213 = vpop.f32.mrf.mxu0
    %214 = vmatprep.mubr.f32.mxu0 0.0
    %215 = vmatmul.mubr.f32.gmra.mxu0 %v104
    %v216 = vpop.f32.mrf.mxu0
    %v217 = vadd.f32 0.0, %v216
    %v218 = vpop.f32.mrf.mxu0
    %219 = vmatprep.mubr.f32.mxu0 0.0
    %220 = vmatmul.mubr.f32.gmra.mxu0 %v105
    %v221 = vpop.f32.mrf.mxu0
    %v222 = vadd.f32 0.0, %v221
    %v223 = vpop.f32.mrf.mxu0
    %224 = vmatprep.mubr.f32.mxu0 0.0
    %225 = vmatmul.mubr.f32.gmra.mxu0 %v106
    %v226 = vpop.f32.mrf.mxu0
    %v227 = vadd.f32 0.0, %v226
    %v228 = vpop.f32.mrf.mxu0
    %229 = vmatprep.mubr.f32.mxu0 0.0
    %230 = vmatmul.mubr.f32.gmra.mxu0 %v107
    %v231 = vpop.f32.mrf.mxu0
    %v232 = vadd.f32 0.0, %v231
    %v233 = vpop.f32.mrf.mxu0
    %234 = vmatprep.mubr.f32.mxu0 0.0
    %235 = vmatmul.mubr.f32.gmra.mxu0 %v108
    %v236 = vpop.f32.mrf.mxu0
    %v237 = vadd.f32 0.0, %v236
    %v238 = vpop.f32.mrf.mxu0
    %239 = vmatprep.mubr.f32.mxu0 0.0
    %240 = vmatmul.mubr.f32.gmra.mxu0 %v109
    %v241 = vpop.f32.mrf.mxu0
    %v242 = vadd.f32 0.0, %v241
    %v243 = vpop.f32.mrf.mxu0
    %244 = vmatprep.mubr.f32.mxu0 0.0
    %245 = vmatmul.mubr.f32.gmra.mxu0 %v110
    %v246 = vpop.f32.mrf.mxu0
    %v247 = vadd.f32 0.0, %v246
    %v248 = vpop.f32.mrf.mxu0
    %249 = vmatprep.mubr.f32.mxu0 0.0
    %250 = vmatmul.mubr.f32.gmra.mxu0 %v111
    %v251 = vpop.f32.mrf.mxu0
    %v252 = vadd.f32 0.0, %v251
    %v253 = vpop.f32.mrf.mxu0
    %254 = vmatprep.mubr.f32.mxu0 0.0
    %255 = vmatmul.mubr.f32.gmra.mxu0 %v112
    %v256 = vpop.f32.mrf.mxu0
    %v257 = vadd.f32 0.0, %v256
    %v258 = vpop.f32.mrf.mxu0
    %259 = vdwg.mxu0
    %276 = vrot.lane.b32.xlu0 %v182, 4
    %v277 = vpop.permute.xlu0 %276
    %278 = vrot.lane.b32.xlu0 %v187, 4
    %v279 = vpop.permute.xlu0 %278
    %280 = vrot.lane.b32.xlu0 %v192, 4
    %v281 = vpop.permute.xlu0 %280
    %282 = vrot.lane.b32.xlu0 %v197, 4
    %v283 = vpop.permute.xlu0 %282
    %284 = vrot.lane.b32.xlu0 %v202, 4
    %v285 = vpop.permute.xlu0 %284
    %286 = vrot.lane.b32.xlu0 %v207, 4
    %v287 = vpop.permute.xlu0 %286
    %288 = vrot.lane.b32.xlu0 %v212, 4
    %v289 = vpop.permute.xlu0 %288
    %290 = vrot.lane.b32.xlu0 %v217, 4
    %v291 = vpop.permute.xlu0 %290
    %292 = vrot.lane.b32.xlu0 %v222, 4
    %v293 = vpop.permute.xlu0 %292
    %294 = vrot.lane.b32.xlu0 %v227, 4
    %v295 = vpop.permute.xlu0 %294
    %296 = vrot.lane.b32.xlu0 %v232, 4
    %v297 = vpop.permute.xlu0 %296
    %298 = vrot.lane.b32.xlu0 %v237, 4
    %v299 = vpop.permute.xlu0 %298
    %300 = vrot.lane.b32.xlu0 %v242, 4
    %v301 = vpop.permute.xlu0 %300
    %302 = vrot.lane.b32.xlu0 %v247, 4
    %v303 = vpop.permute.xlu0 %302
    %304 = vrot.lane.b32.xlu0 %v252, 4
    %v305 = vpop.permute.xlu0 %304
    %306 = vrot.lane.b32.xlu0 %v257, 4
    %v307 = vpop.permute.xlu0 %306
    %vm324 = vcmask 31744
    %v325 = vsel %vm324, %v65, %v277
    %v326 = vsel %vm324, %v66, %v279
    %v327 = vsel %vm324, %v67, %v281
    %v328 = vsel %vm324, %v68, %v283
    %v329 = vsel %vm324, %v69, %v285
    %v330 = vsel %vm324, %v70, %v287
    %v331 = vsel %vm324, %v71, %v289
    %v332 = vsel %vm324, %v72, %v291
    %v333 = vsel %vm324, %v73, %v293
    %v334 = vsel %vm324, %v74, %v295
    %v335 = vsel %vm324, %v75, %v297
    %v336 = vsel %vm324, %v76, %v299
    %v337 = vsel %vm324, %v77, %v301
    %v338 = vsel %vm324, %v78, %v303
    %v339 = vsel %vm324, %v79, %v305
    %v340 = vsel %vm324, %v80, %v307
    %v342 = vlaneseq
    %v343 = vshrl.u32 %v342, 7
    %v344 = vsub.s32 0, %v343
    %v345 = vrot.slane %v114, %v344
    %vm347 = vcmask 64512
    %v349 = vsel %vm347, %v325, 0
    %v352 = vsel %vm347, %v326, 0
    %v355 = vsel %vm347, %v327, 0
    %v358 = vsel %vm347, %v328, 0
    %v361 = vsel %vm347, %v329, 0
    %v364 = vsel %vm347, %v330, 0
    %v367 = vsel %vm347, %v331, 0
    %v370 = vsel %vm347, %v332, 0
    %v373 = vsel %vm347, %v333, 0
    %v376 = vsel %vm347, %v334, 0
    %v379 = vsel %vm347, %v335, 0
    %v382 = vsel %vm347, %v336, 0
    %v385 = vsel %vm347, %v337, 0
    %v388 = vsel %vm347, %v338, 0
    %v391 = vsel %vm347, %v339, 0
    %v394 = vsel %vm347, %v340, 0
    %396 = vmatprep.subr.mxu0 0.0
    %397 = vmatpush1.msra.mxu0 0.0
    %398 = vmatprep.subr.mxu0 0.0
    %399 = vmatpush1.msra.mxu0 0.0
    %400 = vmatprep.subr.mxu0 0.0
    %401 = vmatpush1.msra.mxu0 0.0
    %402 = vmatprep.subr.mxu0 0.0
    %403 = vmatpush1.msra.mxu0 0.0
    %404 = vmatprep.subr.mxu0 0.0
    %405 = vmatpush1.msra.mxu0 0.0
    %406 = vmatprep.subr.mxu0 0.0
    %407 = vmatpush1.msra.mxu0 0.0
    %408 = vmatprep.subr.mxu0 0.0
    %409 = vmatpush1.msra.mxu0 0.0
    %410 = vmatprep.subr.mxu0 0.0
    %411 = vmatpush1.msra.mxu0 0.0
    %412 = vmatprep.subr.mxu0 0.0
    %413 = vmatpush1.msra.mxu0 0.0
    %414 = vmatprep.subr.mxu0 0.0
    %415 = vmatpush1.msra.mxu0 0.0
    %416 = vmatprep.subr.mxu0 0.0
    %417 = vmatpush1.msra.mxu0 0.0
    %418 = vmatprep.subr.mxu0 0.0
    %419 = vmatpush1.msra.mxu0 0.0
    %420 = vmatprep.subr.mxu0 0.0
    %421 = vmatpush1.msra.mxu0 0.0
    %422 = vmatprep.subr.mxu0 0.0
    %423 = vmatpush1.msra.mxu0 0.0
    %424 = vmatprep.subr.mxu0 0.0
    %425 = vmatpush1.msra.mxu0 0.0
    %426 = vmatprep.subr.mxu0 0.0
    %427 = vmatpush1.msra.mxu0 %v113
    %428 = vmatprep.subr.mxu0 0.0
    %429 = vmatpush2.msra.mxu0 0.0
    %430 = vmatprep.subr.mxu0 0.0
    %431 = vmatpush2.msra.mxu0 0.0
    %432 = vmatprep.subr.mxu0 0.0
    %433 = vmatpush2.msra.mxu0 0.0
    %434 = vmatprep.subr.mxu0 0.0
    %435 = vmatpush2.msra.mxu0 0.0
    %436 = vmatprep.subr.mxu0 0.0
    %437 = vmatpush2.msra.mxu0 0.0
    %438 = vmatprep.subr.mxu0 0.0
    %439 = vmatpush2.msra.mxu0 0.0
    %440 = vmatprep.subr.mxu0 0.0
    %441 = vmatpush2.msra.mxu0 0.0
    %442 = vmatprep.subr.mxu0 0.0
    %443 = vmatpush2.msra.mxu0 0.0
    %444 = vmatprep.subr.mxu0 0.0
    %445 = vmatpush2.msra.mxu0 0.0
    %446 = vmatprep.subr.mxu0 0.0
    %447 = vmatpush2.msra.mxu0 0.0
    %448 = vmatprep.subr.mxu0 0.0
    %449 = vmatpush2.msra.mxu0 0.0
    %450 = vmatprep.subr.mxu0 0.0
    %451 = vmatpush2.msra.mxu0 0.0
    %452 = vmatprep.subr.mxu0 0.0
    %453 = vmatpush2.msra.mxu0 0.0
    %454 = vmatprep.subr.mxu0 0.0
    %455 = vmatpush2.msra.mxu0 0.0
    %456 = vmatprep.subr.mxu0 0.0
    %457 = vmatpush2.msra.mxu0 0.0
    %458 = vmatprep.subr.mxu0 0.0
    %459 = vmatpush2.msra.mxu0 0.0
    %460 = vmatprep.mubr.f32.mxu0 0.0
    %461 = vmatmul.mubr.f32.gmra.mxu0 %v349
    %v462 = vpop.f32.mrf.mxu0
    %v463 = vadd.f32 %v345, %v462
    %v464 = vpop.f32.mrf.mxu0
    %465 = vmatprep.mubr.f32.mxu0 0.0
    %466 = vmatmul.mubr.f32.gmra.mxu0 %v352
    %v467 = vpop.f32.mrf.mxu0
    %v468 = vadd.f32 %v345, %v467
    %v469 = vpop.f32.mrf.mxu0
    %470 = vmatprep.mubr.f32.mxu0 0.0
    %471 = vmatmul.mubr.f32.gmra.mxu0 %v355
    %v472 = vpop.f32.mrf.mxu0
    %v473 = vadd.f32 %v345, %v472
    %v474 = vpop.f32.mrf.mxu0
    %475 = vmatprep.mubr.f32.mxu0 0.0
    %476 = vmatmul.mubr.f32.gmra.mxu0 %v358
    %v477 = vpop.f32.mrf.mxu0
    %v478 = vadd.f32 %v345, %v477
    %v479 = vpop.f32.mrf.mxu0
    %480 = vmatprep.mubr.f32.mxu0 0.0
    %481 = vmatmul.mubr.f32.gmra.mxu0 %v361
    %v482 = vpop.f32.mrf.mxu0
    %v483 = vadd.f32 %v345, %v482
    %v484 = vpop.f32.mrf.mxu0
    %485 = vmatprep.mubr.f32.mxu0 0.0
    %486 = vmatmul.mubr.f32.gmra.mxu0 %v364
    %v487 = vpop.f32.mrf.mxu0
    %v488 = vadd.f32 %v345, %v487
    %v489 = vpop.f32.mrf.mxu0
    %490 = vmatprep.mubr.f32.mxu0 0.0
    %491 = vmatmul.mubr.f32.gmra.mxu0 %v367
    %v492 = vpop.f32.mrf.mxu0
    %v493 = vadd.f32 %v345, %v492
    %v494 = vpop.f32.mrf.mxu0
    %495 = vmatprep.mubr.f32.mxu0 0.0
    %496 = vmatmul.mubr.f32.gmra.mxu0 %v370
    %v497 = vpop.f32.mrf.mxu0
    %v498 = vadd.f32 %v345, %v497
    %v499 = vpop.f32.mrf.mxu0
    %500 = vmatprep.mubr.f32.mxu0 0.0
    %501 = vmatmul.mubr.f32.gmra.mxu0 %v373
    %v502 = vpop.f32.mrf.mxu0
    %v503 = vadd.f32 %v345, %v502
    %v504 = vpop.f32.mrf.mxu0
    %505 = vmatprep.mubr.f32.mxu0 0.0
    %506 = vmatmul.mubr.f32.gmra.mxu0 %v376
    %v507 = vpop.f32.mrf.mxu0
    %v508 = vadd.f32 %v345, %v507
    %v509 = vpop.f32.mrf.mxu0
    %510 = vmatprep.mubr.f32.mxu0 0.0
    %511 = vmatmul.mubr.f32.gmra.mxu0 %v379
    %v512 = vpop.f32.mrf.mxu0
    %v513 = vadd.f32 %v345, %v512
    %v514 = vpop.f32.mrf.mxu0
    %515 = vmatprep.mubr.f32.mxu0 0.0
    %516 = vmatmul.mubr.f32.gmra.mxu0 %v382
    %v517 = vpop.f32.mrf.mxu0
    %v518 = vadd.f32 %v345, %v517
    %v519 = vpop.f32.mrf.mxu0
    %520 = vmatprep.mubr.f32.mxu0 0.0
    %521 = vmatmul.mubr.f32.gmra.mxu0 %v385
    %v522 = vpop.f32.mrf.mxu0
    %v523 = vadd.f32 %v345, %v522
    %v524 = vpop.f32.mrf.mxu0
    %525 = vmatprep.mubr.f32.mxu0 0.0
    %526 = vmatmul.mubr.f32.gmra.mxu0 %v388
    %v527 = vpop.f32.mrf.mxu0
    %v528 = vadd.f32 %v345, %v527
    %v529 = vpop.f32.mrf.mxu0
    %530 = vmatprep.mubr.f32.mxu0 0.0
    %531 = vmatmul.mubr.f32.gmra.mxu0 %v391
    %v532 = vpop.f32.mrf.mxu0
    %v533 = vadd.f32 %v345, %v532
    %v534 = vpop.f32.mrf.mxu0
    %535 = vmatprep.mubr.f32.mxu0 0.0
    %536 = vmatmul.mubr.f32.gmra.mxu0 %v394
    %v537 = vpop.f32.mrf.mxu0
    %v538 = vadd.f32 %v345, %v537
    %v539 = vpop.f32.mrf.mxu0
    %540 = vdwg.mxu0
    %v541 = vmax.f32 %v463, 0.0
    %v542 = vmax.f32 %v468, 0.0
    %v543 = vmax.f32 %v473, 0.0
    %v544 = vmax.f32 %v478, 0.0
    %v545 = vmax.f32 %v483, 0.0
    %v546 = vmax.f32 %v488, 0.0
    %v547 = vmax.f32 %v493, 0.0
    %v548 = vmax.f32 %v498, 0.0
    %v549 = vmax.f32 %v503, 0.0
    %v550 = vmax.f32 %v508, 0.0
    %v551 = vmax.f32 %v513, 0.0
    %v552 = vmax.f32 %v518, 0.0
    %v553 = vmax.f32 %v523, 0.0
    %v554 = vmax.f32 %v528, 0.0
    %v555 = vmax.f32 %v533, 0.0
    %v556 = vmax.f32 %v538, 0.0
    %v557 = vld [vmem:[%s5] sm:$0xff]
    %v558 = vld [vmem:[%s5 + $0x8] sm:$0xff]
    %v559 = vld [vmem:[%s6] sm:$0x1]
    %560 = vmatprep.subr.mxu0 0.0
    %561 = vmatpush1.msra.mxu0 %v556
    %562 = vmatprep.subr.mxu0 0.0
    %563 = vmatpush1.msra.mxu0 %v555
    %564 = vmatprep.subr.mxu0 0.0
    %565 = vmatpush1.msra.mxu0 %v554
    %566 = vmatprep.subr.mxu0 0.0
    %567 = vmatpush1.msra.mxu0 %v553
    %568 = vmatprep.subr.mxu0 0.0
    %569 = vmatpush1.msra.mxu0 %v552
    %570 = vmatprep.subr.mxu0 0.0
    %571 = vmatpush1.msra.mxu0 %v551
    %572 = vmatprep.subr.mxu0 0.0
    %573 = vmatpush1.msra.mxu0 %v550
    %574 = vmatprep.subr.mxu0 0.0
    %575 = vmatpush1.msra.mxu0 %v549
    %576 = vmatprep.subr.mxu0 0.0
    %577 = vmatpush1.msra.mxu0 %v548
    %578 = vmatprep.subr.mxu0 0.0
    %579 = vmatpush1.msra.mxu0 %v547
    %580 = vmatprep.subr.mxu0 0.0
    %581 = vmatpush1.msra.mxu0 %v546
    %582 = vmatprep.subr.mxu0 0.0
    %583 = vmatpush1.msra.mxu0 %v545
    %584 = vmatprep.subr.mxu0 0.0
    %585 = vmatpush1.msra.mxu0 %v544
    %586 = vmatprep.subr.mxu0 0.0
    %587 = vmatpush1.msra.mxu0 %v543
    %588 = vmatprep.subr.mxu0 0.0
    %589 = vmatpush1.msra.mxu0 %v542
    %590 = vmatprep.subr.mxu0 0.0
    %591 = vmatpush1.msra.mxu0 %v541
    %592 = vmatprep.subr.mxu0 0.0
    %593 = vmatpush2.msra.mxu0 0.0
    %594 = vmatprep.subr.mxu0 0.0
    %595 = vmatpush2.msra.mxu0 0.0
    %596 = vmatprep.subr.mxu0 0.0
    %597 = vmatpush2.msra.mxu0 0.0
    %598 = vmatprep.subr.mxu0 0.0
    %599 = vmatpush2.msra.mxu0 0.0
    %600 = vmatprep.subr.mxu0 0.0
    %601 = vmatpush2.msra.mxu0 0.0
    %602 = vmatprep.subr.mxu0 0.0
    %603 = vmatpush2.msra.mxu0 0.0
    %604 = vmatprep.subr.mxu0 0.0
    %605 = vmatpush2.msra.mxu0 0.0
    %606 = vmatprep.subr.mxu0 0.0
    %607 = vmatpush2.msra.mxu0 0.0
    %608 = vmatprep.subr.mxu0 0.0
    %609 = vmatpush2.msra.mxu0 0.0
    %610 = vmatprep.subr.mxu0 0.0
    %611 = vmatpush2.msra.mxu0 0.0
    %612 = vmatprep.subr.mxu0 0.0
    %613 = vmatpush2.msra.mxu0 0.0
    %614 = vmatprep.subr.mxu0 0.0
    %615 = vmatpush2.msra.mxu0 0.0
    %616 = vmatprep.subr.mxu0 0.0
    %617 = vmatpush2.msra.mxu0 0.0
    %618 = vmatprep.subr.mxu0 0.0
    %619 = vmatpush2.msra.mxu0 0.0
    %620 = vmatprep.subr.mxu0 0.0
    %621 = vmatpush2.msra.mxu0 0.0
    %622 = vmatprep.subr.mxu0 0.0
    %623 = vmatpush2.msra.mxu0 0.0
    %624 = vmatprep.mubr.f32.mxu0 0.0
    %625 = vmatmul.mubr.f32.gmra.mxu0 %v97
    %v626 = vpop.f32.mrf.mxu0
    %v627 = vadd.f32 0.0, %v626
    %v628 = vpop.f32.mrf.mxu0
    %629 = vmatprep.mubr.f32.mxu0 0.0
    %630 = vmatmul.mubr.f32.gmra.mxu0 %v98
    %v631 = vpop.f32.mrf.mxu0
    %v632 = vadd.f32 0.0, %v631
    %v633 = vpop.f32.mrf.mxu0
    %634 = vmatprep.mubr.f32.mxu0 0.0
    %635 = vmatmul.mubr.f32.gmra.mxu0 %v99
    %v636 = vpop.f32.mrf.mxu0
    %v637 = vadd.f32 0.0, %v636
    %v638 = vpop.f32.mrf.mxu0
    %639 = vmatprep.mubr.f32.mxu0 0.0
    %640 = vmatmul.mubr.f32.gmra.mxu0 %v100
    %v641 = vpop.f32.mrf.mxu0
    %v642 = vadd.f32 0.0, %v641
    %v643 = vpop.f32.mrf.mxu0
    %644 = vmatprep.mubr.f32.mxu0 0.0
    %645 = vmatmul.mubr.f32.gmra.mxu0 %v101
    %v646 = vpop.f32.mrf.mxu0
    %v647 = vadd.f32 0.0, %v646
    %v648 = vpop.f32.mrf.mxu0
    %649 = vmatprep.mubr.f32.mxu0 0.0
    %650 = vmatmul.mubr.f32.gmra.mxu0 %v102
    %v651 = vpop.f32.mrf.mxu0
    %v652 = vadd.f32 0.0, %v651
    %v653 = vpop.f32.mrf.mxu0
    %654 = vmatprep.mubr.f32.mxu0 0.0
    %655 = vmatmul.mubr.f32.gmra.mxu0 %v103
    %v656 = vpop.f32.mrf.mxu0
    %v657 = vadd.f32 0.0, %v656
    %v658 = vpop.f32.mrf.mxu0
    %659 = vmatprep.mubr.f32.mxu0 0.0
    %660 = vmatmul.mubr.f32.gmra.mxu0 %v104
    %v661 = vpop.f32.mrf.mxu0
    %v662 = vadd.f32 0.0, %v661
    %v663 = vpop.f32.mrf.mxu0
    %664 = vmatprep.mubr.f32.mxu0 0.0
    %665 = vmatmul.mubr.f32.gmra.mxu0 %v105
    %v666 = vpop.f32.mrf.mxu0
    %v667 = vadd.f32 0.0, %v666
    %v668 = vpop.f32.mrf.mxu0
    %669 = vmatprep.mubr.f32.mxu0 0.0
    %670 = vmatmul.mubr.f32.gmra.mxu0 %v106
    %v671 = vpop.f32.mrf.mxu0
    %v672 = vadd.f32 0.0, %v671
    %v673 = vpop.f32.mrf.mxu0
    %674 = vmatprep.mubr.f32.mxu0 0.0
    %675 = vmatmul.mubr.f32.gmra.mxu0 %v107
    %v676 = vpop.f32.mrf.mxu0
    %v677 = vadd.f32 0.0, %v676
    %v678 = vpop.f32.mrf.mxu0
    %679 = vmatprep.mubr.f32.mxu0 0.0
    %680 = vmatmul.mubr.f32.gmra.mxu0 %v108
    %v681 = vpop.f32.mrf.mxu0
    %v682 = vadd.f32 0.0, %v681
    %v683 = vpop.f32.mrf.mxu0
    %684 = vmatprep.mubr.f32.mxu0 0.0
    %685 = vmatmul.mubr.f32.gmra.mxu0 %v109
    %v686 = vpop.f32.mrf.mxu0
    %v687 = vadd.f32 0.0, %v686
    %v688 = vpop.f32.mrf.mxu0
    %689 = vmatprep.mubr.f32.mxu0 0.0
    %690 = vmatmul.mubr.f32.gmra.mxu0 %v110
    %v691 = vpop.f32.mrf.mxu0
    %v692 = vadd.f32 0.0, %v691
    %v693 = vpop.f32.mrf.mxu0
    %694 = vmatprep.mubr.f32.mxu0 0.0
    %695 = vmatmul.mubr.f32.gmra.mxu0 %v111
    %v696 = vpop.f32.mrf.mxu0
    %v697 = vadd.f32 0.0, %v696
    %v698 = vpop.f32.mrf.mxu0
    %699 = vmatprep.mubr.f32.mxu0 0.0
    %700 = vmatmul.mubr.f32.gmra.mxu0 %v112
    %v701 = vpop.f32.mrf.mxu0
    %v702 = vadd.f32 0.0, %v701
    %v703 = vpop.f32.mrf.mxu0
    %704 = vdwg.mxu0
    %721 = vrot.lane.b32.xlu0 %v627, 8
    %v722 = vpop.permute.xlu0 %721
    %723 = vrot.lane.b32.xlu0 %v632, 8
    %v724 = vpop.permute.xlu0 %723
    %725 = vrot.lane.b32.xlu0 %v637, 8
    %v726 = vpop.permute.xlu0 %725
    %727 = vrot.lane.b32.xlu0 %v642, 8
    %v728 = vpop.permute.xlu0 %727
    %729 = vrot.lane.b32.xlu0 %v647, 8
    %v730 = vpop.permute.xlu0 %729
    %731 = vrot.lane.b32.xlu0 %v652, 8
    %v732 = vpop.permute.xlu0 %731
    %733 = vrot.lane.b32.xlu0 %v657, 8
    %v734 = vpop.permute.xlu0 %733
    %735 = vrot.lane.b32.xlu0 %v662, 8
    %v736 = vpop.permute.xlu0 %735
    %737 = vrot.lane.b32.xlu0 %v667, 8
    %v738 = vpop.permute.xlu0 %737
    %739 = vrot.lane.b32.xlu0 %v672, 8
    %v740 = vpop.permute.xlu0 %739
    %741 = vrot.lane.b32.xlu0 %v677, 8
    %v742 = vpop.permute.xlu0 %741
    %743 = vrot.lane.b32.xlu0 %v682, 8
    %v744 = vpop.permute.xlu0 %743
    %745 = vrot.lane.b32.xlu0 %v687, 8
    %v746 = vpop.permute.xlu0 %745
    %747 = vrot.lane.b32.xlu0 %v692, 8
    %v748 = vpop.permute.xlu0 %747
    %749 = vrot.lane.b32.xlu0 %v697, 8
    %v750 = vpop.permute.xlu0 %749
    %751 = vrot.lane.b32.xlu0 %v702, 8
    %v752 = vpop.permute.xlu0 %751
    %v769 = vsel %vm347, %v541, %v722
    %v770 = vsel %vm347, %v542, %v724
    %v771 = vsel %vm347, %v543, %v726
    %v772 = vsel %vm347, %v544, %v728
    %v773 = vsel %vm347, %v545, %v730
    %v774 = vsel %vm347, %v546, %v732
    %v775 = vsel %vm347, %v547, %v734
    %v776 = vsel %vm347, %v548, %v736
    %v777 = vsel %vm347, %v549, %v738
    %v778 = vsel %vm347, %v550, %v740
    %v779 = vsel %vm347, %v551, %v742
    %v780 = vsel %vm347, %v552, %v744
    %v781 = vsel %vm347, %v553, %v746
    %v782 = vsel %vm347, %v554, %v748
    %v783 = vsel %vm347, %v555, %v750
    %v784 = vsel %vm347, %v556, %v752
    %v786 = vlaneseq
    %v787 = vshrl.u32 %v786, 7
    %v788 = vsub.s32 0, %v787
    %v789 = vrot.slane %v559, %v788
    %vm791 = vcmask 130048
    %v793 = vsel %vm791, %v769, 0
    %v796 = vsel %vm791, %v770, 0
    %v799 = vsel %vm791, %v771, 0
    %v802 = vsel %vm791, %v772, 0
    %v805 = vsel %vm791, %v773, 0
    %v808 = vsel %vm791, %v774, 0
    %v811 = vsel %vm791, %v775, 0
    %v814 = vsel %vm791, %v776, 0
    %v817 = vsel %vm791, %v777, 0
    %v820 = vsel %vm791, %v778, 0
    %v823 = vsel %vm791, %v779, 0
    %v826 = vsel %vm791, %v780, 0
    %v829 = vsel %vm791, %v781, 0
    %v832 = vsel %vm791, %v782, 0
    %v835 = vsel %vm791, %v783, 0
    %v838 = vsel %vm791, %v784, 0
    %840 = vmatprep.subr.mxu0 0.0
    %841 = vmatpush1.msra.mxu0 0.0
    %842 = vmatprep.subr.mxu0 0.0
    %843 = vmatpush1.msra.mxu0 0.0
    %844 = vmatprep.subr.mxu0 0.0
    %845 = vmatpush1.msra.mxu0 0.0
    %846 = vmatprep.subr.mxu0 0.0
    %847 = vmatpush1.msra.mxu0 0.0
    %848 = vmatprep.subr.mxu0 0.0
    %849 = vmatpush1.msra.mxu0 0.0
    %850 = vmatprep.subr.mxu0 0.0
    %851 = vmatpush1.msra.mxu0 0.0
    %852 = vmatprep.subr.mxu0 0.0
    %853 = vmatpush1.msra.mxu0 0.0
    %854 = vmatprep.subr.mxu0 0.0
    %855 = vmatpush1.msra.mxu0 0.0
    %856 = vmatprep.subr.mxu0 0.0
    %857 = vmatpush1.msra.mxu0 0.0
    %858 = vmatprep.subr.mxu0 0.0
    %859 = vmatpush1.msra.mxu0 0.0
    %860 = vmatprep.subr.mxu0 0.0
    %861 = vmatpush1.msra.mxu0 0.0
    %862 = vmatprep.subr.mxu0 0.0
    %863 = vmatpush1.msra.mxu0 0.0
    %864 = vmatprep.subr.mxu0 0.0
    %865 = vmatpush1.msra.mxu0 0.0
    %866 = vmatprep.subr.mxu0 0.0
    %867 = vmatpush1.msra.mxu0 0.0
    %868 = vmatprep.subr.mxu0 0.0
    %869 = vmatpush1.msra.mxu0 %v558
    %870 = vmatprep.subr.mxu0 0.0
    %871 = vmatpush1.msra.mxu0 %v557
    %872 = vmatprep.subr.mxu0 0.0
    %873 = vmatpush2.msra.mxu0 0.0
    %874 = vmatprep.subr.mxu0 0.0
    %875 = vmatpush2.msra.mxu0 0.0
    %876 = vmatprep.subr.mxu0 0.0
    %877 = vmatpush2.msra.mxu0 0.0
    %878 = vmatprep.subr.mxu0 0.0
    %879 = vmatpush2.msra.mxu0 0.0
    %880 = vmatprep.subr.mxu0 0.0
    %881 = vmatpush2.msra.mxu0 0.0
    %882 = vmatprep.subr.mxu0 0.0
    %883 = vmatpush2.msra.mxu0 0.0
    %884 = vmatprep.subr.mxu0 0.0
    %885 = vmatpush2.msra.mxu0 0.0
    %886 = vmatprep.subr.mxu0 0.0
    %887 = vmatpush2.msra.mxu0 0.0
    %888 = vmatprep.subr.mxu0 0.0
    %889 = vmatpush2.msra.mxu0 0.0
    %890 = vmatprep.subr.mxu0 0.0
    %891 = vmatpush2.msra.mxu0 0.0
    %892 = vmatprep.subr.mxu0 0.0
    %893 = vmatpush2.msra.mxu0 0.0
    %894 = vmatprep.subr.mxu0 0.0
    %895 = vmatpush2.msra.mxu0 0.0
    %896 = vmatprep.subr.mxu0 0.0
    %897 = vmatpush2.msra.mxu0 0.0
    %898 = vmatprep.subr.mxu0 0.0
    %899 = vmatpush2.msra.mxu0 0.0
    %900 = vmatprep.subr.mxu0 0.0
    %901 = vmatpush2.msra.mxu0 0.0
    %902 = vmatprep.subr.mxu0 0.0
    %903 = vmatpush2.msra.mxu0 0.0
    %904 = vmatprep.mubr.f32.mxu0 0.0
    %905 = vmatmul.mubr.f32.gmra.mxu0 %v793
    %v906 = vpop.f32.mrf.mxu0
    %v907 = vadd.f32 %v789, %v906
    %v908 = vpop.f32.mrf.mxu0
    %909 = vmatprep.mubr.f32.mxu0 0.0
    %910 = vmatmul.mubr.f32.gmra.mxu0 %v796
    %v911 = vpop.f32.mrf.mxu0
    %v912 = vadd.f32 %v789, %v911
    %v913 = vpop.f32.mrf.mxu0
    %914 = vmatprep.mubr.f32.mxu0 0.0
    %915 = vmatmul.mubr.f32.gmra.mxu0 %v799
    %v916 = vpop.f32.mrf.mxu0
    %v917 = vadd.f32 %v789, %v916
    %v918 = vpop.f32.mrf.mxu0
    %919 = vmatprep.mubr.f32.mxu0 0.0
    %920 = vmatmul.mubr.f32.gmra.mxu0 %v802
    %v921 = vpop.f32.mrf.mxu0
    %v922 = vadd.f32 %v789, %v921
    %v923 = vpop.f32.mrf.mxu0
    %924 = vmatprep.mubr.f32.mxu0 0.0
    %925 = vmatmul.mubr.f32.gmra.mxu0 %v805
    %v926 = vpop.f32.mrf.mxu0
    %v927 = vadd.f32 %v789, %v926
    %v928 = vpop.f32.mrf.mxu0
    %929 = vmatprep.mubr.f32.mxu0 0.0
    %930 = vmatmul.mubr.f32.gmra.mxu0 %v808
    %v931 = vpop.f32.mrf.mxu0
    %v932 = vadd.f32 %v789, %v931
    %v933 = vpop.f32.mrf.mxu0
    %934 = vmatprep.mubr.f32.mxu0 0.0
    %935 = vmatmul.mubr.f32.gmra.mxu0 %v811
    %v936 = vpop.f32.mrf.mxu0
    %v937 = vadd.f32 %v789, %v936
    %v938 = vpop.f32.mrf.mxu0
    %939 = vmatprep.mubr.f32.mxu0 0.0
    %940 = vmatmul.mubr.f32.gmra.mxu0 %v814
    %v941 = vpop.f32.mrf.mxu0
    %v942 = vadd.f32 %v789, %v941
    %v943 = vpop.f32.mrf.mxu0
    %944 = vmatprep.mubr.f32.mxu0 0.0
    %945 = vmatmul.mubr.f32.gmra.mxu0 %v817
    %v946 = vpop.f32.mrf.mxu0
    %v947 = vadd.f32 %v789, %v946
    %v948 = vpop.f32.mrf.mxu0
    %949 = vmatprep.mubr.f32.mxu0 0.0
    %950 = vmatmul.mubr.f32.gmra.mxu0 %v820
    %v951 = vpop.f32.mrf.mxu0
    %v952 = vadd.f32 %v789, %v951
    %v953 = vpop.f32.mrf.mxu0
    %954 = vmatprep.mubr.f32.mxu0 0.0
    %955 = vmatmul.mubr.f32.gmra.mxu0 %v823
    %v956 = vpop.f32.mrf.mxu0
    %v957 = vadd.f32 %v789, %v956
    %v958 = vpop.f32.mrf.mxu0
    %959 = vmatprep.mubr.f32.mxu0 0.0
    %960 = vmatmul.mubr.f32.gmra.mxu0 %v826
    %v961 = vpop.f32.mrf.mxu0
    %v962 = vadd.f32 %v789, %v961
    %v963 = vpop.f32.mrf.mxu0
    %964 = vmatprep.mubr.f32.mxu0 0.0
    %965 = vmatmul.mubr.f32.gmra.mxu0 %v829
    %v966 = vpop.f32.mrf.mxu0
    %v967 = vadd.f32 %v789, %v966
    %v968 = vpop.f32.mrf.mxu0
    %969 = vmatprep.mubr.f32.mxu0 0.0
    %970 = vmatmul.mubr.f32.gmra.mxu0 %v832
    %v971 = vpop.f32.mrf.mxu0
    %v972 = vadd.f32 %v789, %v971
    %v973 = vpop.f32.mrf.mxu0
    %974 = vmatprep.mubr.f32.mxu0 0.0
    %975 = vmatmul.mubr.f32.gmra.mxu0 %v835
    %v976 = vpop.f32.mrf.mxu0
    %v977 = vadd.f32 %v789, %v976
    %v978 = vpop.f32.mrf.mxu0
    %979 = vmatprep.mubr.f32.mxu0 0.0
    %980 = vmatmul.mubr.f32.gmra.mxu0 %v838
    %v981 = vpop.f32.mrf.mxu0
    %v982 = vadd.f32 %v789, %v981
    %v983 = vpop.f32.mrf.mxu0
    %984 = vdwg.mxu0
    %v985 = vmax.f32 %v907, 0.0
    %v986 = vmax.f32 %v912, 0.0
    %v987 = vmax.f32 %v917, 0.0
    %v988 = vmax.f32 %v922, 0.0
    %v989 = vmax.f32 %v927, 0.0
    %v990 = vmax.f32 %v932, 0.0
    %v991 = vmax.f32 %v937, 0.0
    %v992 = vmax.f32 %v942, 0.0
    %v993 = vmax.f32 %v947, 0.0
    %v994 = vmax.f32 %v952, 0.0
    %v995 = vmax.f32 %v957, 0.0
    %v996 = vmax.f32 %v962, 0.0
    %v997 = vmax.f32 %v967, 0.0
    %v998 = vmax.f32 %v972, 0.0
    %v999 = vmax.f32 %v977, 0.0
    %v1000 = vmax.f32 %v982, 0.0
    %v1001 = vld [vmem:[%s7] sm:$0xff]
    %v1002 = vld [vmem:[%s7 + $0x8] sm:$0xff]
    %v1003 = vld [vmem:[%s8] sm:$0x1]
    %1004 = vmatprep.subr.mxu0 0.0
    %1005 = vmatpush1.msra.mxu0 %v1000
    %1006 = vmatprep.subr.mxu0 0.0
    %1007 = vmatpush1.msra.mxu0 %v999
    %1008 = vmatprep.subr.mxu0 0.0
    %1009 = vmatpush1.msra.mxu0 %v998
    %1010 = vmatprep.subr.mxu0 0.0
    %1011 = vmatpush1.msra.mxu0 %v997
    %1012 = vmatprep.subr.mxu0 0.0
    %1013 = vmatpush1.msra.mxu0 %v996
    %1014 = vmatprep.subr.mxu0 0.0
    %1015 = vmatpush1.msra.mxu0 %v995
    %1016 = vmatprep.subr.mxu0 0.0
    %1017 = vmatpush1.msra.mxu0 %v994
    %1018 = vmatprep.subr.mxu0 0.0
    %1019 = vmatpush1.msra.mxu0 %v993
    %1020 = vmatprep.subr.mxu0 0.0
    %1021 = vmatpush1.msra.mxu0 %v992
    %1022 = vmatprep.subr.mxu0 0.0
    %1023 = vmatpush1.msra.mxu0 %v991
    %1024 = vmatprep.subr.mxu0 0.0
    %1025 = vmatpush1.msra.mxu0 %v990
    %1026 = vmatprep.subr.mxu0 0.0
    %1027 = vmatpush1.msra.mxu0 %v989
    %1028 = vmatprep.subr.mxu0 0.0
    %1029 = vmatpush1.msra.mxu0 %v988
    %1030 = vmatprep.subr.mxu0 0.0
    %1031 = vmatpush1.msra.mxu0 %v987
    %1032 = vmatprep.subr.mxu0 0.0
    %1033 = vmatpush1.msra.mxu0 %v986
    %1034 = vmatprep.subr.mxu0 0.0
    %1035 = vmatpush1.msra.mxu0 %v985
    %1036 = vmatprep.subr.mxu0 0.0
    %1037 = vmatpush2.msra.mxu0 0.0
    %1038 = vmatprep.subr.mxu0 0.0
    %1039 = vmatpush2.msra.mxu0 0.0
    %1040 = vmatprep.subr.mxu0 0.0
    %1041 = vmatpush2.msra.mxu0 0.0
    %1042 = vmatprep.subr.mxu0 0.0
    %1043 = vmatpush2.msra.mxu0 0.0
    %1044 = vmatprep.subr.mxu0 0.0
    %1045 = vmatpush2.msra.mxu0 0.0
    %1046 = vmatprep.subr.mxu0 0.0
    %1047 = vmatpush2.msra.mxu0 0.0
    %1048 = vmatprep.subr.mxu0 0.0
    %1049 = vmatpush2.msra.mxu0 0.0
    %1050 = vmatprep.subr.mxu0 0.0
    %1051 = vmatpush2.msra.mxu0 0.0
    %1052 = vmatprep.subr.mxu0 0.0
    %1053 = vmatpush2.msra.mxu0 0.0
    %1054 = vmatprep.subr.mxu0 0.0
    %1055 = vmatpush2.msra.mxu0 0.0
    %1056 = vmatprep.subr.mxu0 0.0
    %1057 = vmatpush2.msra.mxu0 0.0
    %1058 = vmatprep.subr.mxu0 0.0
    %1059 = vmatpush2.msra.mxu0 0.0
    %1060 = vmatprep.subr.mxu0 0.0
    %1061 = vmatpush2.msra.mxu0 0.0
    %1062 = vmatprep.subr.mxu0 0.0
    %1063 = vmatpush2.msra.mxu0 0.0
    %1064 = vmatprep.subr.mxu0 0.0
    %1065 = vmatpush2.msra.mxu0 0.0
    %1066 = vmatprep.subr.mxu0 0.0
    %1067 = vmatpush2.msra.mxu0 0.0
    %1068 = vmatprep.mubr.f32.mxu0 0.0
    %1069 = vmatmul.mubr.f32.gmra.mxu0 %v97
    %v1070 = vpop.f32.mrf.mxu0
    %v1071 = vadd.f32 0.0, %v1070
    %v1072 = vpop.f32.mrf.mxu0
    %1073 = vmatprep.mubr.f32.mxu0 0.0
    %1074 = vmatmul.mubr.f32.gmra.mxu0 %v98
    %v1075 = vpop.f32.mrf.mxu0
    %v1076 = vadd.f32 0.0, %v1075
    %v1077 = vpop.f32.mrf.mxu0
    %1078 = vmatprep.mubr.f32.mxu0 0.0
    %1079 = vmatmul.mubr.f32.gmra.mxu0 %v99
    %v1080 = vpop.f32.mrf.mxu0
    %v1081 = vadd.f32 0.0, %v1080
    %v1082 = vpop.f32.mrf.mxu0
    %1083 = vmatprep.mubr.f32.mxu0 0.0
    %1084 = vmatmul.mubr.f32.gmra.mxu0 %v100
    %v1085 = vpop.f32.mrf.mxu0
    %v1086 = vadd.f32 0.0, %v1085
    %v1087 = vpop.f32.mrf.mxu0
    %1088 = vmatprep.mubr.f32.mxu0 0.0
    %1089 = vmatmul.mubr.f32.gmra.mxu0 %v101
    %v1090 = vpop.f32.mrf.mxu0
    %v1091 = vadd.f32 0.0, %v1090
    %v1092 = vpop.f32.mrf.mxu0
    %1093 = vmatprep.mubr.f32.mxu0 0.0
    %1094 = vmatmul.mubr.f32.gmra.mxu0 %v102
    %v1095 = vpop.f32.mrf.mxu0
    %v1096 = vadd.f32 0.0, %v1095
    %v1097 = vpop.f32.mrf.mxu0
    %1098 = vmatprep.mubr.f32.mxu0 0.0
    %1099 = vmatmul.mubr.f32.gmra.mxu0 %v103
    %v1100 = vpop.f32.mrf.mxu0
    %v1101 = vadd.f32 0.0, %v1100
    %v1102 = vpop.f32.mrf.mxu0
    %1103 = vmatprep.mubr.f32.mxu0 0.0
    %1104 = vmatmul.mubr.f32.gmra.mxu0 %v104
    %v1105 = vpop.f32.mrf.mxu0
    %v1106 = vadd.f32 0.0, %v1105
    %v1107 = vpop.f32.mrf.mxu0
    %1108 = vmatprep.mubr.f32.mxu0 0.0
    %1109 = vmatmul.mubr.f32.gmra.mxu0 %v105
    %v1110 = vpop.f32.mrf.mxu0
    %v1111 = vadd.f32 0.0, %v1110
    %v1112 = vpop.f32.mrf.mxu0
    %1113 = vmatprep.mubr.f32.mxu0 0.0
    %1114 = vmatmul.mubr.f32.gmra.mxu0 %v106
    %v1115 = vpop.f32.mrf.mxu0
    %v1116 = vadd.f32 0.0, %v1115
    %v1117 = vpop.f32.mrf.mxu0
    %1118 = vmatprep.mubr.f32.mxu0 0.0
    %1119 = vmatmul.mubr.f32.gmra.mxu0 %v107
    %v1120 = vpop.f32.mrf.mxu0
    %v1121 = vadd.f32 0.0, %v1120
    %v1122 = vpop.f32.mrf.mxu0
    %1123 = vmatprep.mubr.f32.mxu0 0.0
    %1124 = vmatmul.mubr.f32.gmra.mxu0 %v108
    %v1125 = vpop.f32.mrf.mxu0
    %v1126 = vadd.f32 0.0, %v1125
    %v1127 = vpop.f32.mrf.mxu0
    %1128 = vmatprep.mubr.f32.mxu0 0.0
    %1129 = vmatmul.mubr.f32.gmra.mxu0 %v109
    %v1130 = vpop.f32.mrf.mxu0
    %v1131 = vadd.f32 0.0, %v1130
    %v1132 = vpop.f32.mrf.mxu0
    %1133 = vmatprep.mubr.f32.mxu0 0.0
    %1134 = vmatmul.mubr.f32.gmra.mxu0 %v110
    %v1135 = vpop.f32.mrf.mxu0
    %v1136 = vadd.f32 0.0, %v1135
    %v1137 = vpop.f32.mrf.mxu0
    %1138 = vmatprep.mubr.f32.mxu0 0.0
    %1139 = vmatmul.mubr.f32.gmra.mxu0 %v111
    %v1140 = vpop.f32.mrf.mxu0
    %v1141 = vadd.f32 0.0, %v1140
    %v1142 = vpop.f32.mrf.mxu0
    %1143 = vmatprep.mubr.f32.mxu0 0.0
    %1144 = vmatmul.mubr.f32.gmra.mxu0 %v112
    %v1145 = vpop.f32.mrf.mxu0
    %v1146 = vadd.f32 0.0, %v1145
    %v1147 = vpop.f32.mrf.mxu0
    %1148 = vdwg.mxu0
    %1165 = vrot.lane.b32.xlu0 %v1071, 8
    %v1166 = vpop.permute.xlu0 %1165
    %1167 = vrot.lane.b32.xlu0 %v1076, 8
    %v1168 = vpop.permute.xlu0 %1167
    %1169 = vrot.lane.b32.xlu0 %v1081, 8
    %v1170 = vpop.permute.xlu0 %1169
    %1171 = vrot.lane.b32.xlu0 %v1086, 8
    %v1172 = vpop.permute.xlu0 %1171
    %1173 = vrot.lane.b32.xlu0 %v1091, 8
    %v1174 = vpop.permute.xlu0 %1173
    %1175 = vrot.lane.b32.xlu0 %v1096, 8
    %v1176 = vpop.permute.xlu0 %1175
    %1177 = vrot.lane.b32.xlu0 %v1101, 8
    %v1178 = vpop.permute.xlu0 %1177
    %1179 = vrot.lane.b32.xlu0 %v1106, 8
    %v1180 = vpop.permute.xlu0 %1179
    %1181 = vrot.lane.b32.xlu0 %v1111, 8
    %v1182 = vpop.permute.xlu0 %1181
    %1183 = vrot.lane.b32.xlu0 %v1116, 8
    %v1184 = vpop.permute.xlu0 %1183
    %1185 = vrot.lane.b32.xlu0 %v1121, 8
    %v1186 = vpop.permute.xlu0 %1185
    %1187 = vrot.lane.b32.xlu0 %v1126, 8
    %v1188 = vpop.permute.xlu0 %1187
    %1189 = vrot.lane.b32.xlu0 %v1131, 8
    %v1190 = vpop.permute.xlu0 %1189
    %1191 = vrot.lane.b32.xlu0 %v1136, 8
    %v1192 = vpop.permute.xlu0 %1191
    %1193 = vrot.lane.b32.xlu0 %v1141, 8
    %v1194 = vpop.permute.xlu0 %1193
    %1195 = vrot.lane.b32.xlu0 %v1146, 8
    %v1196 = vpop.permute.xlu0 %1195
    %v1213 = vsel %vm347, %v985, %v1166
    %v1214 = vsel %vm347, %v986, %v1168
    %v1215 = vsel %vm347, %v987, %v1170
    %v1216 = vsel %vm347, %v988, %v1172
    %v1217 = vsel %vm347, %v989, %v1174
    %v1218 = vsel %vm347, %v990, %v1176
    %v1219 = vsel %vm347, %v991, %v1178
    %v1220 = vsel %vm347, %v992, %v1180
    %v1221 = vsel %vm347, %v993, %v1182
    %v1222 = vsel %vm347, %v994, %v1184
    %v1223 = vsel %vm347, %v995, %v1186
    %v1224 = vsel %vm347, %v996, %v1188
    %v1225 = vsel %vm347, %v997, %v1190
    %v1226 = vsel %vm347, %v998, %v1192
    %v1227 = vsel %vm347, %v999, %v1194
    %v1228 = vsel %vm347, %v1000, %v1196
    %v1230 = vlaneseq
    %v1231 = vshrl.u32 %v1230, 7
    %v1232 = vsub.s32 0, %v1231
    %v1233 = vrot.slane %v1003, %v1232
    %v1236 = vsel %vm791, %v1213, 0
    %v1239 = vsel %vm791, %v1214, 0
    %v1242 = vsel %vm791, %v1215, 0
    %v1245 = vsel %vm791, %v1216, 0
    %v1248 = vsel %vm791, %v1217, 0
    %v1251 = vsel %vm791, %v1218, 0
    %v1254 = vsel %vm791, %v1219, 0
    %v1257 = vsel %vm791, %v1220, 0
    %v1260 = vsel %vm791, %v1221, 0
    %v1263 = vsel %vm791, %v1222, 0
    %v1266 = vsel %vm791, %v1223, 0
    %v1269 = vsel %vm791, %v1224, 0
    %v1272 = vsel %vm791, %v1225, 0
    %v1275 = vsel %vm791, %v1226, 0
    %v1278 = vsel %vm791, %v1227, 0
    %v1281 = vsel %vm791, %v1228, 0
    %1283 = vmatprep.subr.mxu0 0.0
    %1284 = vmatpush1.msra.mxu0 0.0
    %1285 = vmatprep.subr.mxu0 0.0
    %1286 = vmatpush1.msra.mxu0 0.0
    %1287 = vmatprep.subr.mxu0 0.0
    %1288 = vmatpush1.msra.mxu0 0.0
    %1289 = vmatprep.subr.mxu0 0.0
    %1290 = vmatpush1.msra.mxu0 0.0
    %1291 = vmatprep.subr.mxu0 0.0
    %1292 = vmatpush1.msra.mxu0 0.0
    %1293 = vmatprep.subr.mxu0 0.0
    %1294 = vmatpush1.msra.mxu0 0.0
    %1295 = vmatprep.subr.mxu0 0.0
    %1296 = vmatpush1.msra.mxu0 0.0
    %1297 = vmatprep.subr.mxu0 0.0
    %1298 = vmatpush1.msra.mxu0 0.0
    %1299 = vmatprep.subr.mxu0 0.0
    %1300 = vmatpush1.msra.mxu0 0.0
    %1301 = vmatprep.subr.mxu0 0.0
    %1302 = vmatpush1.msra.mxu0 0.0
    %1303 = vmatprep.subr.mxu0 0.0
    %1304 = vmatpush1.msra.mxu0 0.0
    %1305 = vmatprep.subr.mxu0 0.0
    %1306 = vmatpush1.msra.mxu0 0.0
    %1307 = vmatprep.subr.mxu0 0.0
    %1308 = vmatpush1.msra.mxu0 0.0
    %1309 = vmatprep.subr.mxu0 0.0
    %1310 = vmatpush1.msra.mxu0 0.0
    %1311 = vmatprep.subr.mxu0 0.0
    %1312 = vmatpush1.msra.mxu0 %v1002
    %1313 = vmatprep.subr.mxu0 0.0
    %1314 = vmatpush1.msra.mxu0 %v1001
    %1315 = vmatprep.subr.mxu0 0.0
    %1316 = vmatpush2.msra.mxu0 0.0
    %1317 = vmatprep.subr.mxu0 0.0
    %1318 = vmatpush2.msra.mxu0 0.0
    %1319 = vmatprep.subr.mxu0 0.0
    %1320 = vmatpush2.msra.mxu0 0.0
    %1321 = vmatprep.subr.mxu0 0.0
    %1322 = vmatpush2.msra.mxu0 0.0
    %1323 = vmatprep.subr.mxu0 0.0
    %1324 = vmatpush2.msra.mxu0 0.0
    %1325 = vmatprep.subr.mxu0 0.0
    %1326 = vmatpush2.msra.mxu0 0.0
    %1327 = vmatprep.subr.mxu0 0.0
    %1328 = vmatpush2.msra.mxu0 0.0
    %1329 = vmatprep.subr.mxu0 0.0
    %1330 = vmatpush2.msra.mxu0 0.0
    %1331 = vmatprep.subr.mxu0 0.0
    %1332 = vmatpush2.msra.mxu0 0.0
    %1333 = vmatprep.subr.mxu0 0.0
    %1334 = vmatpush2.msra.mxu0 0.0
    %1335 = vmatprep.subr.mxu0 0.0
    %1336 = vmatpush2.msra.mxu0 0.0
    %1337 = vmatprep.subr.mxu0 0.0
    %1338 = vmatpush2.msra.mxu0 0.0
    %1339 = vmatprep.subr.mxu0 0.0
    %1340 = vmatpush2.msra.mxu0 0.0
    %1341 = vmatprep.subr.mxu0 0.0
    %1342 = vmatpush2.msra.mxu0 0.0
    %1343 = vmatprep.subr.mxu0 0.0
    %1344 = vmatpush2.msra.mxu0 0.0
    %1345 = vmatprep.subr.mxu0 0.0
    %1346 = vmatpush2.msra.mxu0 0.0
    %1347 = vmatprep.mubr.f32.mxu0 0.0
    %1348 = vmatmul.mubr.f32.gmra.mxu0 %v1236
    %v1349 = vpop.f32.mrf.mxu0
    %v1350 = vadd.f32 %v1233, %v1349
    %v1351 = vpop.f32.mrf.mxu0
    %1352 = vmatprep.mubr.f32.mxu0 0.0
    %1353 = vmatmul.mubr.f32.gmra.mxu0 %v1239
    %v1354 = vpop.f32.mrf.mxu0
    %v1355 = vadd.f32 %v1233, %v1354
    %v1356 = vpop.f32.mrf.mxu0
    %1357 = vmatprep.mubr.f32.mxu0 0.0
    %1358 = vmatmul.mubr.f32.gmra.mxu0 %v1242
    %v1359 = vpop.f32.mrf.mxu0
    %v1360 = vadd.f32 %v1233, %v1359
    %v1361 = vpop.f32.mrf.mxu0
    %1362 = vmatprep.mubr.f32.mxu0 0.0
    %1363 = vmatmul.mubr.f32.gmra.mxu0 %v1245
    %v1364 = vpop.f32.mrf.mxu0
    %v1365 = vadd.f32 %v1233, %v1364
    %v1366 = vpop.f32.mrf.mxu0
    %1367 = vmatprep.mubr.f32.mxu0 0.0
    %1368 = vmatmul.mubr.f32.gmra.mxu0 %v1248
    %v1369 = vpop.f32.mrf.mxu0
    %v1370 = vadd.f32 %v1233, %v1369
    %v1371 = vpop.f32.mrf.mxu0
    %1372 = vmatprep.mubr.f32.mxu0 0.0
    %1373 = vmatmul.mubr.f32.gmra.mxu0 %v1251
    %v1374 = vpop.f32.mrf.mxu0
    %v1375 = vadd.f32 %v1233, %v1374
    %v1376 = vpop.f32.mrf.mxu0
    %1377 = vmatprep.mubr.f32.mxu0 0.0
    %1378 = vmatmul.mubr.f32.gmra.mxu0 %v1254
    %v1379 = vpop.f32.mrf.mxu0
    %v1380 = vadd.f32 %v1233, %v1379
    %v1381 = vpop.f32.mrf.mxu0
    %1382 = vmatprep.mubr.f32.mxu0 0.0
    %1383 = vmatmul.mubr.f32.gmra.mxu0 %v1257
    %v1384 = vpop.f32.mrf.mxu0
    %v1385 = vadd.f32 %v1233, %v1384
    %v1386 = vpop.f32.mrf.mxu0
    %1387 = vmatprep.mubr.f32.mxu0 0.0
    %1388 = vmatmul.mubr.f32.gmra.mxu0 %v1260
    %v1389 = vpop.f32.mrf.mxu0
    %v1390 = vadd.f32 %v1233, %v1389
    %v1391 = vpop.f32.mrf.mxu0
    %1392 = vmatprep.mubr.f32.mxu0 0.0
    %1393 = vmatmul.mubr.f32.gmra.mxu0 %v1263
    %v1394 = vpop.f32.mrf.mxu0
    %v1395 = vadd.f32 %v1233, %v1394
    %v1396 = vpop.f32.mrf.mxu0
    %1397 = vmatprep.mubr.f32.mxu0 0.0
    %1398 = vmatmul.mubr.f32.gmra.mxu0 %v1266
    %v1399 = vpop.f32.mrf.mxu0
    %v1400 = vadd.f32 %v1233, %v1399
    %v1401 = vpop.f32.mrf.mxu0
    %1402 = vmatprep.mubr.f32.mxu0 0.0
    %1403 = vmatmul.mubr.f32.gmra.mxu0 %v1269
    %v1404 = vpop.f32.mrf.mxu0
    %v1405 = vadd.f32 %v1233, %v1404
    %v1406 = vpop.f32.mrf.mxu0
    %1407 = vmatprep.mubr.f32.mxu0 0.0
    %1408 = vmatmul.mubr.f32.gmra.mxu0 %v1272
    %v1409 = vpop.f32.mrf.mxu0
    %v1410 = vadd.f32 %v1233, %v1409
    %v1411 = vpop.f32.mrf.mxu0
    %1412 = vmatprep.mubr.f32.mxu0 0.0
    %1413 = vmatmul.mubr.f32.gmra.mxu0 %v1275
    %v1414 = vpop.f32.mrf.mxu0
    %v1415 = vadd.f32 %v1233, %v1414
    %v1416 = vpop.f32.mrf.mxu0
    %1417 = vmatprep.mubr.f32.mxu0 0.0
    %1418 = vmatmul.mubr.f32.gmra.mxu0 %v1278
    %v1419 = vpop.f32.mrf.mxu0
    %v1420 = vadd.f32 %v1233, %v1419
    %v1421 = vpop.f32.mrf.mxu0
    %1422 = vmatprep.mubr.f32.mxu0 0.0
    %1423 = vmatmul.mubr.f32.gmra.mxu0 %v1281
    %v1424 = vpop.f32.mrf.mxu0
    %v1425 = vadd.f32 %v1233, %v1424
    %v1426 = vpop.f32.mrf.mxu0
    %1427 = vdwg.mxu0
    %v1428 = vmax.f32 %v1350, 0.0
    %v1429 = vmax.f32 %v1355, 0.0
    %v1430 = vmax.f32 %v1360, 0.0
    %v1431 = vmax.f32 %v1365, 0.0
    %v1432 = vmax.f32 %v1370, 0.0
    %v1433 = vmax.f32 %v1375, 0.0
    %v1434 = vmax.f32 %v1380, 0.0
    %v1435 = vmax.f32 %v1385, 0.0
    %v1436 = vmax.f32 %v1390, 0.0
    %v1437 = vmax.f32 %v1395, 0.0
    %v1438 = vmax.f32 %v1400, 0.0
    %v1439 = vmax.f32 %v1405, 0.0
    %v1440 = vmax.f32 %v1410, 0.0
    %v1441 = vmax.f32 %v1415, 0.0
    %v1442 = vmax.f32 %v1420, 0.0
    %v1443 = vmax.f32 %v1425, 0.0
    %v1444 = vld [vmem:[%s9] sm:$0xff]
    %v1445 = vld [vmem:[%s9 + $0x8] sm:$0xff]
    %v1446 = vld [vmem:[%s9 + $0x10] sm:$0xff]
    %v1447 = vld [vmem:[%s9 + $0x18] sm:$0xff]
    %v1448 = vld [vmem:[%s10] sm:$0x1]
    %1449 = vmatprep.subr.mxu0 0.0
    %1450 = vmatpush1.msra.mxu0 %v1443
    %1451 = vmatprep.subr.mxu0 0.0
    %1452 = vmatpush1.msra.mxu0 %v1442
    %1453 = vmatprep.subr.mxu0 0.0
    %1454 = vmatpush1.msra.mxu0 %v1441
    %1455 = vmatprep.subr.mxu0 0.0
    %1456 = vmatpush1.msra.mxu0 %v1440
    %1457 = vmatprep.subr.mxu0 0.0
    %1458 = vmatpush1.msra.mxu0 %v1439
    %1459 = vmatprep.subr.mxu0 0.0
    %1460 = vmatpush1.msra.mxu0 %v1438
    %1461 = vmatprep.subr.mxu0 0.0
    %1462 = vmatpush1.msra.mxu0 %v1437
    %1463 = vmatprep.subr.mxu0 0.0
    %1464 = vmatpush1.msra.mxu0 %v1436
    %1465 = vmatprep.subr.mxu0 0.0
    %1466 = vmatpush1.msra.mxu0 %v1435
    %1467 = vmatprep.subr.mxu0 0.0
    %1468 = vmatpush1.msra.mxu0 %v1434
    %1469 = vmatprep.subr.mxu0 0.0
    %1470 = vmatpush1.msra.mxu0 %v1433
    %1471 = vmatprep.subr.mxu0 0.0
    %1472 = vmatpush1.msra.mxu0 %v1432
    %1473 = vmatprep.subr.mxu0 0.0
    %1474 = vmatpush1.msra.mxu0 %v1431
    %1475 = vmatprep.subr.mxu0 0.0
    %1476 = vmatpush1.msra.mxu0 %v1430
    %1477 = vmatprep.subr.mxu0 0.0
    %1478 = vmatpush1.msra.mxu0 %v1429
    %1479 = vmatprep.subr.mxu0 0.0
    %1480 = vmatpush1.msra.mxu0 %v1428
    %1481 = vmatprep.subr.mxu0 0.0
    %1482 = vmatpush2.msra.mxu0 0.0
    %1483 = vmatprep.subr.mxu0 0.0
    %1484 = vmatpush2.msra.mxu0 0.0
    %1485 = vmatprep.subr.mxu0 0.0
    %1486 = vmatpush2.msra.mxu0 0.0
    %1487 = vmatprep.subr.mxu0 0.0
    %1488 = vmatpush2.msra.mxu0 0.0
    %1489 = vmatprep.subr.mxu0 0.0
    %1490 = vmatpush2.msra.mxu0 0.0
    %1491 = vmatprep.subr.mxu0 0.0
    %1492 = vmatpush2.msra.mxu0 0.0
    %1493 = vmatprep.subr.mxu0 0.0
    %1494 = vmatpush2.msra.mxu0 0.0
    %1495 = vmatprep.subr.mxu0 0.0
    %1496 = vmatpush2.msra.mxu0 0.0
    %1497 = vmatprep.subr.mxu0 0.0
    %1498 = vmatpush2.msra.mxu0 0.0
    %1499 = vmatprep.subr.mxu0 0.0
    %1500 = vmatpush2.msra.mxu0 0.0
    %1501 = vmatprep.subr.mxu0 0.0
    %1502 = vmatpush2.msra.mxu0 0.0
    %1503 = vmatprep.subr.mxu0 0.0
    %1504 = vmatpush2.msra.mxu0 0.0
    %1505 = vmatprep.subr.mxu0 0.0
    %1506 = vmatpush2.msra.mxu0 0.0
    %1507 = vmatprep.subr.mxu0 0.0
    %1508 = vmatpush2.msra.mxu0 0.0
    %1509 = vmatprep.subr.mxu0 0.0
    %1510 = vmatpush2.msra.mxu0 0.0
    %1511 = vmatprep.subr.mxu0 0.0
    %1512 = vmatpush2.msra.mxu0 0.0
    %1513 = vmatprep.mubr.f32.mxu0 0.0
    %1514 = vmatmul.mubr.f32.gmra.mxu0 %v97
    %v1515 = vpop.f32.mrf.mxu0
    %v1516 = vadd.f32 0.0, %v1515
    %v1517 = vpop.f32.mrf.mxu0
    %1518 = vmatprep.mubr.f32.mxu0 0.0
    %1519 = vmatmul.mubr.f32.gmra.mxu0 %v98
    %v1520 = vpop.f32.mrf.mxu0
    %v1521 = vadd.f32 0.0, %v1520
    %v1522 = vpop.f32.mrf.mxu0
    %1523 = vmatprep.mubr.f32.mxu0 0.0
    %1524 = vmatmul.mubr.f32.gmra.mxu0 %v99
    %v1525 = vpop.f32.mrf.mxu0
    %v1526 = vadd.f32 0.0, %v1525
    %v1527 = vpop.f32.mrf.mxu0
    %1528 = vmatprep.mubr.f32.mxu0 0.0
    %1529 = vmatmul.mubr.f32.gmra.mxu0 %v100
    %v1530 = vpop.f32.mrf.mxu0
    %v1531 = vadd.f32 0.0, %v1530
    %v1532 = vpop.f32.mrf.mxu0
    %1533 = vmatprep.mubr.f32.mxu0 0.0
    %1534 = vmatmul.mubr.f32.gmra.mxu0 %v101
    %v1535 = vpop.f32.mrf.mxu0
    %v1536 = vadd.f32 0.0, %v1535
    %v1537 = vpop.f32.mrf.mxu0
    %1538 = vmatprep.mubr.f32.mxu0 0.0
    %1539 = vmatmul.mubr.f32.gmra.mxu0 %v102
    %v1540 = vpop.f32.mrf.mxu0
    %v1541 = vadd.f32 0.0, %v1540
    %v1542 = vpop.f32.mrf.mxu0
    %1543 = vmatprep.mubr.f32.mxu0 0.0
    %1544 = vmatmul.mubr.f32.gmra.mxu0 %v103
    %v1545 = vpop.f32.mrf.mxu0
    %v1546 = vadd.f32 0.0, %v1545
    %v1547 = vpop.f32.mrf.mxu0
    %1548 = vmatprep.mubr.f32.mxu0 0.0
    %1549 = vmatmul.mubr.f32.gmra.mxu0 %v104
    %v1550 = vpop.f32.mrf.mxu0
    %v1551 = vadd.f32 0.0, %v1550
    %v1552 = vpop.f32.mrf.mxu0
    %1553 = vmatprep.mubr.f32.mxu0 0.0
    %1554 = vmatmul.mubr.f32.gmra.mxu0 %v105
    %v1555 = vpop.f32.mrf.mxu0
    %v1556 = vadd.f32 0.0, %v1555
    %v1557 = vpop.f32.mrf.mxu0
    %1558 = vmatprep.mubr.f32.mxu0 0.0
    %1559 = vmatmul.mubr.f32.gmra.mxu0 %v106
    %v1560 = vpop.f32.mrf.mxu0
    %v1561 = vadd.f32 0.0, %v1560
    %v1562 = vpop.f32.mrf.mxu0
    %1563 = vmatprep.mubr.f32.mxu0 0.0
    %1564 = vmatmul.mubr.f32.gmra.mxu0 %v107
    %v1565 = vpop.f32.mrf.mxu0
    %v1566 = vadd.f32 0.0, %v1565
    %v1567 = vpop.f32.mrf.mxu0
    %1568 = vmatprep.mubr.f32.mxu0 0.0
    %1569 = vmatmul.mubr.f32.gmra.mxu0 %v108
    %v1570 = vpop.f32.mrf.mxu0
    %v1571 = vadd.f32 0.0, %v1570
    %v1572 = vpop.f32.mrf.mxu0
    %1573 = vmatprep.mubr.f32.mxu0 0.0
    %1574 = vmatmul.mubr.f32.gmra.mxu0 %v109
    %v1575 = vpop.f32.mrf.mxu0
    %v1576 = vadd.f32 0.0, %v1575
    %v1577 = vpop.f32.mrf.mxu0
    %1578 = vmatprep.mubr.f32.mxu0 0.0
    %1579 = vmatmul.mubr.f32.gmra.mxu0 %v110
    %v1580 = vpop.f32.mrf.mxu0
    %v1581 = vadd.f32 0.0, %v1580
    %v1582 = vpop.f32.mrf.mxu0
    %1583 = vmatprep.mubr.f32.mxu0 0.0
    %1584 = vmatmul.mubr.f32.gmra.mxu0 %v111
    %v1585 = vpop.f32.mrf.mxu0
    %v1586 = vadd.f32 0.0, %v1585
    %v1587 = vpop.f32.mrf.mxu0
    %1588 = vmatprep.mubr.f32.mxu0 0.0
    %1589 = vmatmul.mubr.f32.gmra.mxu0 %v112
    %v1590 = vpop.f32.mrf.mxu0
    %v1591 = vadd.f32 0.0, %v1590
    %v1592 = vpop.f32.mrf.mxu0
    %1593 = vdwg.mxu0
    %1610 = vrot.lane.b32.xlu0 %v1516, 16
    %v1611 = vpop.permute.xlu0 %1610
    %1612 = vrot.lane.b32.xlu0 %v1521, 16
    %v1613 = vpop.permute.xlu0 %1612
    %1614 = vrot.lane.b32.xlu0 %v1526, 16
    %v1615 = vpop.permute.xlu0 %1614
    %1616 = vrot.lane.b32.xlu0 %v1531, 16
    %v1617 = vpop.permute.xlu0 %1616
    %1618 = vrot.lane.b32.xlu0 %v1536, 16
    %v1619 = vpop.permute.xlu0 %1618
    %1620 = vrot.lane.b32.xlu0 %v1541, 16
    %v1621 = vpop.permute.xlu0 %1620
    %1622 = vrot.lane.b32.xlu0 %v1546, 16
    %v1623 = vpop.permute.xlu0 %1622
    %1624 = vrot.lane.b32.xlu0 %v1551, 16
    %v1625 = vpop.permute.xlu0 %1624
    %1626 = vrot.lane.b32.xlu0 %v1556, 16
    %v1627 = vpop.permute.xlu0 %1626
    %1628 = vrot.lane.b32.xlu0 %v1561, 16
    %v1629 = vpop.permute.xlu0 %1628
    %1630 = vrot.lane.b32.xlu0 %v1566, 16
    %v1631 = vpop.permute.xlu0 %1630
    %1632 = vrot.lane.b32.xlu0 %v1571, 16
    %v1633 = vpop.permute.xlu0 %1632
    %1634 = vrot.lane.b32.xlu0 %v1576, 16
    %v1635 = vpop.permute.xlu0 %1634
    %1636 = vrot.lane.b32.xlu0 %v1581, 16
    %v1637 = vpop.permute.xlu0 %1636
    %1638 = vrot.lane.b32.xlu0 %v1586, 16
    %v1639 = vpop.permute.xlu0 %1638
    %1640 = vrot.lane.b32.xlu0 %v1591, 16
    %v1641 = vpop.permute.xlu0 %1640
    %v1658 = vsel %vm791, %v1428, %v1611
    %v1659 = vsel %vm791, %v1429, %v1613
    %v1660 = vsel %vm791, %v1430, %v1615
    %v1661 = vsel %vm791, %v1431, %v1617
    %v1662 = vsel %vm791, %v1432, %v1619
    %v1663 = vsel %vm791, %v1433, %v1621
    %v1664 = vsel %vm791, %v1434, %v1623
    %v1665 = vsel %vm791, %v1435, %v1625
    %v1666 = vsel %vm791, %v1436, %v1627
    %v1667 = vsel %vm791, %v1437, %v1629
    %v1668 = vsel %vm791, %v1438, %v1631
    %v1669 = vsel %vm791, %v1439, %v1633
    %v1670 = vsel %vm791, %v1440, %v1635
    %v1671 = vsel %vm791, %v1441, %v1637
    %v1672 = vsel %vm791, %v1442, %v1639
    %v1673 = vsel %vm791, %v1443, %v1641
    %v1675 = vlaneseq
    %v1676 = vshrl.u32 %v1675, 7
    %v1677 = vsub.s32 0, %v1676
    %v1678 = vrot.slane %v1448, %v1677
    %vm1680 = vcmask 261120
    %v1682 = vsel %vm1680, %v1658, 0
    %v1685 = vsel %vm1680, %v1659, 0
    %v1688 = vsel %vm1680, %v1660, 0
    %v1691 = vsel %vm1680, %v1661, 0
    %v1694 = vsel %vm1680, %v1662, 0
    %v1697 = vsel %vm1680, %v1663, 0
    %v1700 = vsel %vm1680, %v1664, 0
    %v1703 = vsel %vm1680, %v1665, 0
    %v1706 = vsel %vm1680, %v1666, 0
    %v1709 = vsel %vm1680, %v1667, 0
    %v1712 = vsel %vm1680, %v1668, 0
    %v1715 = vsel %vm1680, %v1669, 0
    %v1718 = vsel %vm1680, %v1670, 0
    %v1721 = vsel %vm1680, %v1671, 0
    %v1724 = vsel %vm1680, %v1672, 0
    %v1727 = vsel %vm1680, %v1673, 0
    %1729 = vmatprep.subr.mxu0 0.0
    %1730 = vmatpush1.msra.mxu0 0.0
    %1731 = vmatprep.subr.mxu0 0.0
    %1732 = vmatpush1.msra.mxu0 0.0
    %1733 = vmatprep.subr.mxu0 0.0
    %1734 = vmatpush1.msra.mxu0 0.0
    %1735 = vmatprep.subr.mxu0 0.0
    %1736 = vmatpush1.msra.mxu0 0.0
    %1737 = vmatprep.subr.mxu0 0.0
    %1738 = vmatpush1.msra.mxu0 0.0
    %1739 = vmatprep.subr.mxu0 0.0
    %1740 = vmatpush1.msra.mxu0 0.0
    %1741 = vmatprep.subr.mxu0 0.0
    %1742 = vmatpush1.msra.mxu0 0.0
    %1743 = vmatprep.subr.mxu0 0.0
    %1744 = vmatpush1.msra.mxu0 0.0
    %1745 = vmatprep.subr.mxu0 0.0
    %1746 = vmatpush1.msra.mxu0 0.0
    %1747 = vmatprep.subr.mxu0 0.0
    %1748 = vmatpush1.msra.mxu0 0.0
    %1749 = vmatprep.subr.mxu0 0.0
    %1750 = vmatpush1.msra.mxu0 0.0
    %1751 = vmatprep.subr.mxu0 0.0
    %1752 = vmatpush1.msra.mxu0 0.0
    %1753 = vmatprep.subr.mxu0 0.0
    %1754 = vmatpush1.msra.mxu0 %v1447
    %1755 = vmatprep.subr.mxu0 0.0
    %1756 = vmatpush1.msra.mxu0 %v1446
    %1757 = vmatprep.subr.mxu0 0.0
    %1758 = vmatpush1.msra.mxu0 %v1445
    %1759 = vmatprep.subr.mxu0 0.0
    %1760 = vmatpush1.msra.mxu0 %v1444
    %1761 = vmatprep.subr.mxu0 0.0
    %1762 = vmatpush2.msra.mxu0 0.0
    %1763 = vmatprep.subr.mxu0 0.0
    %1764 = vmatpush2.msra.mxu0 0.0
    %1765 = vmatprep.subr.mxu0 0.0
    %1766 = vmatpush2.msra.mxu0 0.0
    %1767 = vmatprep.subr.mxu0 0.0
    %1768 = vmatpush2.msra.mxu0 0.0
    %1769 = vmatprep.subr.mxu0 0.0
    %1770 = vmatpush2.msra.mxu0 0.0
    %1771 = vmatprep.subr.mxu0 0.0
    %1772 = vmatpush2.msra.mxu0 0.0
    %1773 = vmatprep.subr.mxu0 0.0
    %1774 = vmatpush2.msra.mxu0 0.0
    %1775 = vmatprep.subr.mxu0 0.0
    %1776 = vmatpush2.msra.mxu0 0.0
    %1777 = vmatprep.subr.mxu0 0.0
    %1778 = vmatpush2.msra.mxu0 0.0
    %1779 = vmatprep.subr.mxu0 0.0
    %1780 = vmatpush2.msra.mxu0 0.0
    %1781 = vmatprep.subr.mxu0 0.0
    %1782 = vmatpush2.msra.mxu0 0.0
    %1783 = vmatprep.subr.mxu0 0.0
    %1784 = vmatpush2.msra.mxu0 0.0
    %1785 = vmatprep.subr.mxu0 0.0
    %1786 = vmatpush2.msra.mxu0 0.0
    %1787 = vmatprep.subr.mxu0 0.0
    %1788 = vmatpush2.msra.mxu0 0.0
    %1789 = vmatprep.subr.mxu0 0.0
    %1790 = vmatpush2.msra.mxu0 0.0
    %1791 = vmatprep.subr.mxu0 0.0
    %1792 = vmatpush2.msra.mxu0 0.0
    %1793 = vmatprep.mubr.f32.mxu0 0.0
    %1794 = vmatmul.mubr.f32.gmra.mxu0 %v1682
    %v1795 = vpop.f32.mrf.mxu0
    %v1796 = vadd.f32 %v1678, %v1795
    %v1797 = vpop.f32.mrf.mxu0
    %1798 = vmatprep.mubr.f32.mxu0 0.0
    %1799 = vmatmul.mubr.f32.gmra.mxu0 %v1685
    %v1800 = vpop.f32.mrf.mxu0
    %v1801 = vadd.f32 %v1678, %v1800
    %v1802 = vpop.f32.mrf.mxu0
    %1803 = vmatprep.mubr.f32.mxu0 0.0
    %1804 = vmatmul.mubr.f32.gmra.mxu0 %v1688
    %v1805 = vpop.f32.mrf.mxu0
    %v1806 = vadd.f32 %v1678, %v1805
    %v1807 = vpop.f32.mrf.mxu0
    %1808 = vmatprep.mubr.f32.mxu0 0.0
    %1809 = vmatmul.mubr.f32.gmra.mxu0 %v1691
    %v1810 = vpop.f32.mrf.mxu0
    %v1811 = vadd.f32 %v1678, %v1810
    %v1812 = vpop.f32.mrf.mxu0
    %1813 = vmatprep.mubr.f32.mxu0 0.0
    %1814 = vmatmul.mubr.f32.gmra.mxu0 %v1694
    %v1815 = vpop.f32.mrf.mxu0
    %v1816 = vadd.f32 %v1678, %v1815
    %v1817 = vpop.f32.mrf.mxu0
    %1818 = vmatprep.mubr.f32.mxu0 0.0
    %1819 = vmatmul.mubr.f32.gmra.mxu0 %v1697
    %v1820 = vpop.f32.mrf.mxu0
    %v1821 = vadd.f32 %v1678, %v1820
    %v1822 = vpop.f32.mrf.mxu0
    %1823 = vmatprep.mubr.f32.mxu0 0.0
    %1824 = vmatmul.mubr.f32.gmra.mxu0 %v1700
    %v1825 = vpop.f32.mrf.mxu0
    %v1826 = vadd.f32 %v1678, %v1825
    %v1827 = vpop.f32.mrf.mxu0
    %1828 = vmatprep.mubr.f32.mxu0 0.0
    %1829 = vmatmul.mubr.f32.gmra.mxu0 %v1703
    %v1830 = vpop.f32.mrf.mxu0
    %v1831 = vadd.f32 %v1678, %v1830
    %v1832 = vpop.f32.mrf.mxu0
    %1833 = vmatprep.mubr.f32.mxu0 0.0
    %1834 = vmatmul.mubr.f32.gmra.mxu0 %v1706
    %v1835 = vpop.f32.mrf.mxu0
    %v1836 = vadd.f32 %v1678, %v1835
    %v1837 = vpop.f32.mrf.mxu0
    %1838 = vmatprep.mubr.f32.mxu0 0.0
    %1839 = vmatmul.mubr.f32.gmra.mxu0 %v1709
    %v1840 = vpop.f32.mrf.mxu0
    %v1841 = vadd.f32 %v1678, %v1840
    %v1842 = vpop.f32.mrf.mxu0
    %1843 = vmatprep.mubr.f32.mxu0 0.0
    %1844 = vmatmul.mubr.f32.gmra.mxu0 %v1712
    %v1845 = vpop.f32.mrf.mxu0
    %v1846 = vadd.f32 %v1678, %v1845
    %v1847 = vpop.f32.mrf.mxu0
    %1848 = vmatprep.mubr.f32.mxu0 0.0
    %1849 = vmatmul.mubr.f32.gmra.mxu0 %v1715
    %v1850 = vpop.f32.mrf.mxu0
    %v1851 = vadd.f32 %v1678, %v1850
    %v1852 = vpop.f32.mrf.mxu0
    %1853 = vmatprep.mubr.f32.mxu0 0.0
    %1854 = vmatmul.mubr.f32.gmra.mxu0 %v1718
    %v1855 = vpop.f32.mrf.mxu0
    %v1856 = vadd.f32 %v1678, %v1855
    %v1857 = vpop.f32.mrf.mxu0
    %1858 = vmatprep.mubr.f32.mxu0 0.0
    %1859 = vmatmul.mubr.f32.gmra.mxu0 %v1721
    %v1860 = vpop.f32.mrf.mxu0
    %v1861 = vadd.f32 %v1678, %v1860
    %v1862 = vpop.f32.mrf.mxu0
    %1863 = vmatprep.mubr.f32.mxu0 0.0
    %1864 = vmatmul.mubr.f32.gmra.mxu0 %v1724
    %v1865 = vpop.f32.mrf.mxu0
    %v1866 = vadd.f32 %v1678, %v1865
    %v1867 = vpop.f32.mrf.mxu0
    %1868 = vmatprep.mubr.f32.mxu0 0.0
    %1869 = vmatmul.mubr.f32.gmra.mxu0 %v1727
    %v1870 = vpop.f32.mrf.mxu0
    %v1871 = vadd.f32 %v1678, %v1870
    %v1872 = vpop.f32.mrf.mxu0
    %1873 = vdwg.mxu0
    %v1874 = vmax.f32 %v1796, 0.0
    %v1875 = vmax.f32 %v1801, 0.0
    %v1876 = vmax.f32 %v1806, 0.0
    %v1877 = vmax.f32 %v1811, 0.0
    %v1878 = vmax.f32 %v1816, 0.0
    %v1879 = vmax.f32 %v1821, 0.0
    %v1880 = vmax.f32 %v1826, 0.0
    %v1881 = vmax.f32 %v1831, 0.0
    %v1882 = vmax.f32 %v1836, 0.0
    %v1883 = vmax.f32 %v1841, 0.0
    %v1884 = vmax.f32 %v1846, 0.0
    %v1885 = vmax.f32 %v1851, 0.0
    %v1886 = vmax.f32 %v1856, 0.0
    %v1887 = vmax.f32 %v1861, 0.0
    %v1888 = vmax.f32 %v1866, 0.0
    %v1889 = vmax.f32 %v1871, 0.0
    %v1890 = vld [vmem:[%s11] sm:$0xff]
    %v1891 = vld [vmem:[%s11 + $0x8] sm:$0xff]
    %v1892 = vld [vmem:[%s11 + $0x10] sm:$0xff]
    %v1893 = vld [vmem:[%s11 + $0x18] sm:$0xff]
    %v1894 = vld [vmem:[%s12] sm:$0x1]
    %1895 = vmatprep.subr.mxu0 0.0
    %1896 = vmatpush1.msra.mxu0 %v1889
    %1897 = vmatprep.subr.mxu0 0.0
    %1898 = vmatpush1.msra.mxu0 %v1888
    %1899 = vmatprep.subr.mxu0 0.0
    %1900 = vmatpush1.msra.mxu0 %v1887
    %1901 = vmatprep.subr.mxu0 0.0
    %1902 = vmatpush1.msra.mxu0 %v1886
    %1903 = vmatprep.subr.mxu0 0.0
    %1904 = vmatpush1.msra.mxu0 %v1885
    %1905 = vmatprep.subr.mxu0 0.0
    %1906 = vmatpush1.msra.mxu0 %v1884
    %1907 = vmatprep.subr.mxu0 0.0
    %1908 = vmatpush1.msra.mxu0 %v1883
    %1909 = vmatprep.subr.mxu0 0.0
    %1910 = vmatpush1.msra.mxu0 %v1882
    %1911 = vmatprep.subr.mxu0 0.0
    %1912 = vmatpush1.msra.mxu0 %v1881
    %1913 = vmatprep.subr.mxu0 0.0
    %1914 = vmatpush1.msra.mxu0 %v1880
    %1915 = vmatprep.subr.mxu0 0.0
    %1916 = vmatpush1.msra.mxu0 %v1879
    %1917 = vmatprep.subr.mxu0 0.0
    %1918 = vmatpush1.msra.mxu0 %v1878
    %1919 = vmatprep.subr.mxu0 0.0
    %1920 = vmatpush1.msra.mxu0 %v1877
    %1921 = vmatprep.subr.mxu0 0.0
    %1922 = vmatpush1.msra.mxu0 %v1876
    %1923 = vmatprep.subr.mxu0 0.0
    %1924 = vmatpush1.msra.mxu0 %v1875
    %1925 = vmatprep.subr.mxu0 0.0
    %1926 = vmatpush1.msra.mxu0 %v1874
    %1927 = vmatprep.subr.mxu0 0.0
    %1928 = vmatpush2.msra.mxu0 0.0
    %1929 = vmatprep.subr.mxu0 0.0
    %1930 = vmatpush2.msra.mxu0 0.0
    %1931 = vmatprep.subr.mxu0 0.0
    %1932 = vmatpush2.msra.mxu0 0.0
    %1933 = vmatprep.subr.mxu0 0.0
    %1934 = vmatpush2.msra.mxu0 0.0
    %1935 = vmatprep.subr.mxu0 0.0
    %1936 = vmatpush2.msra.mxu0 0.0
    %1937 = vmatprep.subr.mxu0 0.0
    %1938 = vmatpush2.msra.mxu0 0.0
    %1939 = vmatprep.subr.mxu0 0.0
    %1940 = vmatpush2.msra.mxu0 0.0
    %1941 = vmatprep.subr.mxu0 0.0
    %1942 = vmatpush2.msra.mxu0 0.0
    %1943 = vmatprep.subr.mxu0 0.0
    %1944 = vmatpush2.msra.mxu0 0.0
    %1945 = vmatprep.subr.mxu0 0.0
    %1946 = vmatpush2.msra.mxu0 0.0
    %1947 = vmatprep.subr.mxu0 0.0
    %1948 = vmatpush2.msra.mxu0 0.0
    %1949 = vmatprep.subr.mxu0 0.0
    %1950 = vmatpush2.msra.mxu0 0.0
    %1951 = vmatprep.subr.mxu0 0.0
    %1952 = vmatpush2.msra.mxu0 0.0
    %1953 = vmatprep.subr.mxu0 0.0
    %1954 = vmatpush2.msra.mxu0 0.0
    %1955 = vmatprep.subr.mxu0 0.0
    %1956 = vmatpush2.msra.mxu0 0.0
    %1957 = vmatprep.subr.mxu0 0.0
    %1958 = vmatpush2.msra.mxu0 0.0
    %1959 = vmatprep.mubr.f32.mxu0 0.0
    %1960 = vmatmul.mubr.f32.gmra.mxu0 %v97
    %v1961 = vpop.f32.mrf.mxu0
    %v1962 = vadd.f32 0.0, %v1961
    %v1963 = vpop.f32.mrf.mxu0
    %1964 = vmatprep.mubr.f32.mxu0 0.0
    %1965 = vmatmul.mubr.f32.gmra.mxu0 %v98
    %v1966 = vpop.f32.mrf.mxu0
    %v1967 = vadd.f32 0.0, %v1966
    %v1968 = vpop.f32.mrf.mxu0
    %1969 = vmatprep.mubr.f32.mxu0 0.0
    %1970 = vmatmul.mubr.f32.gmra.mxu0 %v99
    %v1971 = vpop.f32.mrf.mxu0
    %v1972 = vadd.f32 0.0, %v1971
    %v1973 = vpop.f32.mrf.mxu0
    %1974 = vmatprep.mubr.f32.mxu0 0.0
    %1975 = vmatmul.mubr.f32.gmra.mxu0 %v100
    %v1976 = vpop.f32.mrf.mxu0
    %v1977 = vadd.f32 0.0, %v1976
    %v1978 = vpop.f32.mrf.mxu0
    %1979 = vmatprep.mubr.f32.mxu0 0.0
    %1980 = vmatmul.mubr.f32.gmra.mxu0 %v101
    %v1981 = vpop.f32.mrf.mxu0
    %v1982 = vadd.f32 0.0, %v1981
    %v1983 = vpop.f32.mrf.mxu0
    %1984 = vmatprep.mubr.f32.mxu0 0.0
    %1985 = vmatmul.mubr.f32.gmra.mxu0 %v102
    %v1986 = vpop.f32.mrf.mxu0
    %v1987 = vadd.f32 0.0, %v1986
    %v1988 = vpop.f32.mrf.mxu0
    %1989 = vmatprep.mubr.f32.mxu0 0.0
    %1990 = vmatmul.mubr.f32.gmra.mxu0 %v103
    %v1991 = vpop.f32.mrf.mxu0
    %v1992 = vadd.f32 0.0, %v1991
    %v1993 = vpop.f32.mrf.mxu0
    %1994 = vmatprep.mubr.f32.mxu0 0.0
    %1995 = vmatmul.mubr.f32.gmra.mxu0 %v104
    %v1996 = vpop.f32.mrf.mxu0
    %v1997 = vadd.f32 0.0, %v1996
    %v1998 = vpop.f32.mrf.mxu0
    %1999 = vmatprep.mubr.f32.mxu0 0.0
    %2000 = vmatmul.mubr.f32.gmra.mxu0 %v105
    %v2001 = vpop.f32.mrf.mxu0
    %v2002 = vadd.f32 0.0, %v2001
    %v2003 = vpop.f32.mrf.mxu0
    %2004 = vmatprep.mubr.f32.mxu0 0.0
    %2005 = vmatmul.mubr.f32.gmra.mxu0 %v106
    %v2006 = vpop.f32.mrf.mxu0
    %v2007 = vadd.f32 0.0, %v2006
    %v2008 = vpop.f32.mrf.mxu0
    %2009 = vmatprep.mubr.f32.mxu0 0.0
    %2010 = vmatmul.mubr.f32.gmra.mxu0 %v107
    %v2011 = vpop.f32.mrf.mxu0
    %v2012 = vadd.f32 0.0, %v2011
    %v2013 = vpop.f32.mrf.mxu0
    %2014 = vmatprep.mubr.f32.mxu0 0.0
    %2015 = vmatmul.mubr.f32.gmra.mxu0 %v108
    %v2016 = vpop.f32.mrf.mxu0
    %v2017 = vadd.f32 0.0, %v2016
    %v2018 = vpop.f32.mrf.mxu0
    %2019 = vmatprep.mubr.f32.mxu0 0.0
    %2020 = vmatmul.mubr.f32.gmra.mxu0 %v109
    %v2021 = vpop.f32.mrf.mxu0
    %v2022 = vadd.f32 0.0, %v2021
    %v2023 = vpop.f32.mrf.mxu0
    %2024 = vmatprep.mubr.f32.mxu0 0.0
    %2025 = vmatmul.mubr.f32.gmra.mxu0 %v110
    %v2026 = vpop.f32.mrf.mxu0
    %v2027 = vadd.f32 0.0, %v2026
    %v2028 = vpop.f32.mrf.mxu0
    %2029 = vmatprep.mubr.f32.mxu0 0.0
    %2030 = vmatmul.mubr.f32.gmra.mxu0 %v111
    %v2031 = vpop.f32.mrf.mxu0
    %v2032 = vadd.f32 0.0, %v2031
    %v2033 = vpop.f32.mrf.mxu0
    %2034 = vmatprep.mubr.f32.mxu0 0.0
    %2035 = vmatmul.mubr.f32.gmra.mxu0 %v112
    %v2036 = vpop.f32.mrf.mxu0
    %v2037 = vadd.f32 0.0, %v2036
    %v2038 = vpop.f32.mrf.mxu0
    %2039 = vdwg.mxu0
    %2056 = vrot.lane.b32.xlu0 %v1962, 16
    %v2057 = vpop.permute.xlu0 %2056
    %2058 = vrot.lane.b32.xlu0 %v1967, 16
    %v2059 = vpop.permute.xlu0 %2058
    %2060 = vrot.lane.b32.xlu0 %v1972, 16
    %v2061 = vpop.permute.xlu0 %2060
    %2062 = vrot.lane.b32.xlu0 %v1977, 16
    %v2063 = vpop.permute.xlu0 %2062
    %2064 = vrot.lane.b32.xlu0 %v1982, 16
    %v2065 = vpop.permute.xlu0 %2064
    %2066 = vrot.lane.b32.xlu0 %v1987, 16
    %v2067 = vpop.permute.xlu0 %2066
    %2068 = vrot.lane.b32.xlu0 %v1992, 16
    %v2069 = vpop.permute.xlu0 %2068
    %2070 = vrot.lane.b32.xlu0 %v1997, 16
    %v2071 = vpop.permute.xlu0 %2070
    %2072 = vrot.lane.b32.xlu0 %v2002, 16
    %v2073 = vpop.permute.xlu0 %2072
    %2074 = vrot.lane.b32.xlu0 %v2007, 16
    %v2075 = vpop.permute.xlu0 %2074
    %2076 = vrot.lane.b32.xlu0 %v2012, 16
    %v2077 = vpop.permute.xlu0 %2076
    %2078 = vrot.lane.b32.xlu0 %v2017, 16
    %v2079 = vpop.permute.xlu0 %2078
    %2080 = vrot.lane.b32.xlu0 %v2022, 16
    %v2081 = vpop.permute.xlu0 %2080
    %2082 = vrot.lane.b32.xlu0 %v2027, 16
    %v2083 = vpop.permute.xlu0 %2082
    %2084 = vrot.lane.b32.xlu0 %v2032, 16
    %v2085 = vpop.permute.xlu0 %2084
    %2086 = vrot.lane.b32.xlu0 %v2037, 16
    %v2087 = vpop.permute.xlu0 %2086
    %v2104 = vsel %vm791, %v1874, %v2057
    %v2105 = vsel %vm791, %v1875, %v2059
    %v2106 = vsel %vm791, %v1876, %v2061
    %v2107 = vsel %vm791, %v1877, %v2063
    %v2108 = vsel %vm791, %v1878, %v2065
    %v2109 = vsel %vm791, %v1879, %v2067
    %v2110 = vsel %vm791, %v1880, %v2069
    %v2111 = vsel %vm791, %v1881, %v2071
    %v2112 = vsel %vm791, %v1882, %v2073
    %v2113 = vsel %vm791, %v1883, %v2075
    %v2114 = vsel %vm791, %v1884, %v2077
    %v2115 = vsel %vm791, %v1885, %v2079
    %v2116 = vsel %vm791, %v1886, %v2081
    %v2117 = vsel %vm791, %v1887, %v2083
    %v2118 = vsel %vm791, %v1888, %v2085
    %v2119 = vsel %vm791, %v1889, %v2087
    %v2121 = vlaneseq
    %v2122 = vshrl.u32 %v2121, 7
    %v2123 = vsub.s32 0, %v2122
    %v2124 = vrot.slane %v1894, %v2123
    %v2127 = vsel %vm1680, %v2104, 0
    %v2130 = vsel %vm1680, %v2105, 0
    %v2133 = vsel %vm1680, %v2106, 0
    %v2136 = vsel %vm1680, %v2107, 0
    %v2139 = vsel %vm1680, %v2108, 0
    %v2142 = vsel %vm1680, %v2109, 0
    %v2145 = vsel %vm1680, %v2110, 0
    %v2148 = vsel %vm1680, %v2111, 0
    %v2151 = vsel %vm1680, %v2112, 0
    %v2154 = vsel %vm1680, %v2113, 0
    %v2157 = vsel %vm1680, %v2114, 0
    %v2160 = vsel %vm1680, %v2115, 0
    %v2163 = vsel %vm1680, %v2116, 0
    %v2166 = vsel %vm1680, %v2117, 0
    %v2169 = vsel %vm1680, %v2118, 0
    %v2172 = vsel %vm1680, %v2119, 0
    %2174 = vmatprep.subr.mxu0 0.0
    %2175 = vmatpush1.msra.mxu0 0.0
    %2176 = vmatprep.subr.mxu0 0.0
    %2177 = vmatpush1.msra.mxu0 0.0
    %2178 = vmatprep.subr.mxu0 0.0
    %2179 = vmatpush1.msra.mxu0 0.0
    %2180 = vmatprep.subr.mxu0 0.0
    %2181 = vmatpush1.msra.mxu0 0.0
    %2182 = vmatprep.subr.mxu0 0.0
    %2183 = vmatpush1.msra.mxu0 0.0
    %2184 = vmatprep.subr.mxu0 0.0
    %2185 = vmatpush1.msra.mxu0 0.0
    %2186 = vmatprep.subr.mxu0 0.0
    %2187 = vmatpush1.msra.mxu0 0.0
    %2188 = vmatprep.subr.mxu0 0.0
    %2189 = vmatpush1.msra.mxu0 0.0
    %2190 = vmatprep.subr.mxu0 0.0
    %2191 = vmatpush1.msra.mxu0 0.0
    %2192 = vmatprep.subr.mxu0 0.0
    %2193 = vmatpush1.msra.mxu0 0.0
    %2194 = vmatprep.subr.mxu0 0.0
    %2195 = vmatpush1.msra.mxu0 0.0
    %2196 = vmatprep.subr.mxu0 0.0
    %2197 = vmatpush1.msra.mxu0 0.0
    %2198 = vmatprep.subr.mxu0 0.0
    %2199 = vmatpush1.msra.mxu0 %v1893
    %2200 = vmatprep.subr.mxu0 0.0
    %2201 = vmatpush1.msra.mxu0 %v1892
    %2202 = vmatprep.subr.mxu0 0.0
    %2203 = vmatpush1.msra.mxu0 %v1891
    %2204 = vmatprep.subr.mxu0 0.0
    %2205 = vmatpush1.msra.mxu0 %v1890
    %2206 = vmatprep.subr.mxu0 0.0
    %2207 = vmatpush2.msra.mxu0 0.0
    %2208 = vmatprep.subr.mxu0 0.0
    %2209 = vmatpush2.msra.mxu0 0.0
    %2210 = vmatprep.subr.mxu0 0.0
    %2211 = vmatpush2.msra.mxu0 0.0
    %2212 = vmatprep.subr.mxu0 0.0
    %2213 = vmatpush2.msra.mxu0 0.0
    %2214 = vmatprep.subr.mxu0 0.0
    %2215 = vmatpush2.msra.mxu0 0.0
    %2216 = vmatprep.subr.mxu0 0.0
    %2217 = vmatpush2.msra.mxu0 0.0
    %2218 = vmatprep.subr.mxu0 0.0
    %2219 = vmatpush2.msra.mxu0 0.0
    %2220 = vmatprep.subr.mxu0 0.0
    %2221 = vmatpush2.msra.mxu0 0.0
    %2222 = vmatprep.subr.mxu0 0.0
    %2223 = vmatpush2.msra.mxu0 0.0
    %2224 = vmatprep.subr.mxu0 0.0
    %2225 = vmatpush2.msra.mxu0 0.0
    %2226 = vmatprep.subr.mxu0 0.0
    %2227 = vmatpush2.msra.mxu0 0.0
    %2228 = vmatprep.subr.mxu0 0.0
    %2229 = vmatpush2.msra.mxu0 0.0
    %2230 = vmatprep.subr.mxu0 0.0
    %2231 = vmatpush2.msra.mxu0 0.0
    %2232 = vmatprep.subr.mxu0 0.0
    %2233 = vmatpush2.msra.mxu0 0.0
    %2234 = vmatprep.subr.mxu0 0.0
    %2235 = vmatpush2.msra.mxu0 0.0
    %2236 = vmatprep.subr.mxu0 0.0
    %2237 = vmatpush2.msra.mxu0 0.0
    %2238 = vmatprep.mubr.f32.mxu0 0.0
    %2239 = vmatmul.mubr.f32.gmra.mxu0 %v2127
    %v2240 = vpop.f32.mrf.mxu0
    %v2241 = vadd.f32 %v2124, %v2240
    %v2242 = vpop.f32.mrf.mxu0
    %2243 = vmatprep.mubr.f32.mxu0 0.0
    %2244 = vmatmul.mubr.f32.gmra.mxu0 %v2130
    %v2245 = vpop.f32.mrf.mxu0
    %v2246 = vadd.f32 %v2124, %v2245
    %v2247 = vpop.f32.mrf.mxu0
    %2248 = vmatprep.mubr.f32.mxu0 0.0
    %2249 = vmatmul.mubr.f32.gmra.mxu0 %v2133
    %v2250 = vpop.f32.mrf.mxu0
    %v2251 = vadd.f32 %v2124, %v2250
    %v2252 = vpop.f32.mrf.mxu0
    %2253 = vmatprep.mubr.f32.mxu0 0.0
    %2254 = vmatmul.mubr.f32.gmra.mxu0 %v2136
    %v2255 = vpop.f32.mrf.mxu0
    %v2256 = vadd.f32 %v2124, %v2255
    %v2257 = vpop.f32.mrf.mxu0
    %2258 = vmatprep.mubr.f32.mxu0 0.0
    %2259 = vmatmul.mubr.f32.gmra.mxu0 %v2139
    %v2260 = vpop.f32.mrf.mxu0
    %v2261 = vadd.f32 %v2124, %v2260
    %v2262 = vpop.f32.mrf.mxu0
    %2263 = vmatprep.mubr.f32.mxu0 0.0
    %2264 = vmatmul.mubr.f32.gmra.mxu0 %v2142
    %v2265 = vpop.f32.mrf.mxu0
    %v2266 = vadd.f32 %v2124, %v2265
    %v2267 = vpop.f32.mrf.mxu0
    %2268 = vmatprep.mubr.f32.mxu0 0.0
    %2269 = vmatmul.mubr.f32.gmra.mxu0 %v2145
    %v2270 = vpop.f32.mrf.mxu0
    %v2271 = vadd.f32 %v2124, %v2270
    %v2272 = vpop.f32.mrf.mxu0
    %2273 = vmatprep.mubr.f32.mxu0 0.0
    %2274 = vmatmul.mubr.f32.gmra.mxu0 %v2148
    %v2275 = vpop.f32.mrf.mxu0
    %v2276 = vadd.f32 %v2124, %v2275
    %v2277 = vpop.f32.mrf.mxu0
    %2278 = vmatprep.mubr.f32.mxu0 0.0
    %2279 = vmatmul.mubr.f32.gmra.mxu0 %v2151
    %v2280 = vpop.f32.mrf.mxu0
    %v2281 = vadd.f32 %v2124, %v2280
    %v2282 = vpop.f32.mrf.mxu0
    %2283 = vmatprep.mubr.f32.mxu0 0.0
    %2284 = vmatmul.mubr.f32.gmra.mxu0 %v2154
    %v2285 = vpop.f32.mrf.mxu0
    %v2286 = vadd.f32 %v2124, %v2285
    %v2287 = vpop.f32.mrf.mxu0
    %2288 = vmatprep.mubr.f32.mxu0 0.0
    %2289 = vmatmul.mubr.f32.gmra.mxu0 %v2157
    %v2290 = vpop.f32.mrf.mxu0
    %v2291 = vadd.f32 %v2124, %v2290
    %v2292 = vpop.f32.mrf.mxu0
    %2293 = vmatprep.mubr.f32.mxu0 0.0
    %2294 = vmatmul.mubr.f32.gmra.mxu0 %v2160
    %v2295 = vpop.f32.mrf.mxu0
    %v2296 = vadd.f32 %v2124, %v2295
    %v2297 = vpop.f32.mrf.mxu0
    %2298 = vmatprep.mubr.f32.mxu0 0.0
    %2299 = vmatmul.mubr.f32.gmra.mxu0 %v2163
    %v2300 = vpop.f32.mrf.mxu0
    %v2301 = vadd.f32 %v2124, %v2300
    %v2302 = vpop.f32.mrf.mxu0
    %2303 = vmatprep.mubr.f32.mxu0 0.0
    %2304 = vmatmul.mubr.f32.gmra.mxu0 %v2166
    %v2305 = vpop.f32.mrf.mxu0
    %v2306 = vadd.f32 %v2124, %v2305
    %v2307 = vpop.f32.mrf.mxu0
    %2308 = vmatprep.mubr.f32.mxu0 0.0
    %2309 = vmatmul.mubr.f32.gmra.mxu0 %v2169
    %v2310 = vpop.f32.mrf.mxu0
    %v2311 = vadd.f32 %v2124, %v2310
    %v2312 = vpop.f32.mrf.mxu0
    %2313 = vmatprep.mubr.f32.mxu0 0.0
    %2314 = vmatmul.mubr.f32.gmra.mxu0 %v2172
    %v2315 = vpop.f32.mrf.mxu0
    %v2316 = vadd.f32 %v2124, %v2315
    %v2317 = vpop.f32.mrf.mxu0
    %2318 = vdwg.mxu0
    %v2319 = vmax.f32 %v2241, 0.0
    %v2320 = vmax.f32 %v2246, 0.0
    %v2321 = vmax.f32 %v2251, 0.0
    %v2322 = vmax.f32 %v2256, 0.0
    %v2323 = vmax.f32 %v2261, 0.0
    %v2324 = vmax.f32 %v2266, 0.0
    %v2325 = vmax.f32 %v2271, 0.0
    %v2326 = vmax.f32 %v2276, 0.0
    %v2327 = vmax.f32 %v2281, 0.0
    %v2328 = vmax.f32 %v2286, 0.0
    %v2329 = vmax.f32 %v2291, 0.0
    %v2330 = vmax.f32 %v2296, 0.0
    %v2331 = vmax.f32 %v2301, 0.0
    %v2332 = vmax.f32 %v2306, 0.0
    %v2333 = vmax.f32 %v2311, 0.0
    %v2334 = vmax.f32 %v2316, 0.0
    %v2335 = vld [vmem:[%s13] sm:$0xff]
    %v2336 = vld [vmem:[%s13 + $0x8] sm:$0xff]
    %v2337 = vld [vmem:[%s13 + $0x10] sm:$0xff]
    %v2338 = vld [vmem:[%s13 + $0x18] sm:$0xff]
    %v2339 = vld [vmem:[%s13 + $0x20] sm:$0xff]
    %v2340 = vld [vmem:[%s13 + $0x28] sm:$0xff]
    %v2341 = vld [vmem:[%s13 + $0x30] sm:$0xff]
    %v2342 = vld [vmem:[%s13 + $0x38] sm:$0xff]
    %v2343 = vld [vmem:[%s14] sm:$0x1]
    %2344 = vmatprep.subr.mxu0 0.0
    %2345 = vmatpush1.msra.mxu0 %v2334
    %2346 = vmatprep.subr.mxu0 0.0
    %2347 = vmatpush1.msra.mxu0 %v2333
    %2348 = vmatprep.subr.mxu0 0.0
    %2349 = vmatpush1.msra.mxu0 %v2332
    %2350 = vmatprep.subr.mxu0 0.0
    %2351 = vmatpush1.msra.mxu0 %v2331
    %2352 = vmatprep.subr.mxu0 0.0
    %2353 = vmatpush1.msra.mxu0 %v2330
    %2354 = vmatprep.subr.mxu0 0.0
    %2355 = vmatpush1.msra.mxu0 %v2329
    %2356 = vmatprep.subr.mxu0 0.0
    %2357 = vmatpush1.msra.mxu0 %v2328
    %2358 = vmatprep.subr.mxu0 0.0
    %2359 = vmatpush1.msra.mxu0 %v2327
    %2360 = vmatprep.subr.mxu0 0.0
    %2361 = vmatpush1.msra.mxu0 %v2326
    %2362 = vmatprep.subr.mxu0 0.0
    %2363 = vmatpush1.msra.mxu0 %v2325
    %2364 = vmatprep.subr.mxu0 0.0
    %2365 = vmatpush1.msra.mxu0 %v2324
    %2366 = vmatprep.subr.mxu0 0.0
    %2367 = vmatpush1.msra.mxu0 %v2323
    %2368 = vmatprep.subr.mxu0 0.0
    %2369 = vmatpush1.msra.mxu0 %v2322
    %2370 = vmatprep.subr.mxu0 0.0
    %2371 = vmatpush1.msra.mxu0 %v2321
    %2372 = vmatprep.subr.mxu0 0.0
    %2373 = vmatpush1.msra.mxu0 %v2320
    %2374 = vmatprep.subr.mxu0 0.0
    %2375 = vmatpush1.msra.mxu0 %v2319
    %2376 = vmatprep.subr.mxu0 0.0
    %2377 = vmatpush2.msra.mxu0 0.0
    %2378 = vmatprep.subr.mxu0 0.0
    %2379 = vmatpush2.msra.mxu0 0.0
    %2380 = vmatprep.subr.mxu0 0.0
    %2381 = vmatpush2.msra.mxu0 0.0
    %2382 = vmatprep.subr.mxu0 0.0
    %2383 = vmatpush2.msra.mxu0 0.0
    %2384 = vmatprep.subr.mxu0 0.0
    %2385 = vmatpush2.msra.mxu0 0.0
    %2386 = vmatprep.subr.mxu0 0.0
    %2387 = vmatpush2.msra.mxu0 0.0
    %2388 = vmatprep.subr.mxu0 0.0
    %2389 = vmatpush2.msra.mxu0 0.0
    %2390 = vmatprep.subr.mxu0 0.0
    %2391 = vmatpush2.msra.mxu0 0.0
    %2392 = vmatprep.subr.mxu0 0.0
    %2393 = vmatpush2.msra.mxu0 0.0
    %2394 = vmatprep.subr.mxu0 0.0
    %2395 = vmatpush2.msra.mxu0 0.0
    %2396 = vmatprep.subr.mxu0 0.0
    %2397 = vmatpush2.msra.mxu0 0.0
    %2398 = vmatprep.subr.mxu0 0.0
    %2399 = vmatpush2.msra.mxu0 0.0
    %2400 = vmatprep.subr.mxu0 0.0
    %2401 = vmatpush2.msra.mxu0 0.0
    %2402 = vmatprep.subr.mxu0 0.0
    %2403 = vmatpush2.msra.mxu0 0.0
    %2404 = vmatprep.subr.mxu0 0.0
    %2405 = vmatpush2.msra.mxu0 0.0
    %2406 = vmatprep.subr.mxu0 0.0
    %2407 = vmatpush2.msra.mxu0 0.0
    %2408 = vmatprep.mubr.f32.mxu0 0.0
    %2409 = vmatmul.mubr.f32.gmra.mxu0 %v97
    %v2410 = vpop.f32.mrf.mxu0
    %v2411 = vadd.f32 0.0, %v2410
    %v2412 = vpop.f32.mrf.mxu0
    %2413 = vmatprep.mubr.f32.mxu0 0.0
    %2414 = vmatmul.mubr.f32.gmra.mxu0 %v98
    %v2415 = vpop.f32.mrf.mxu0
    %v2416 = vadd.f32 0.0, %v2415
    %v2417 = vpop.f32.mrf.mxu0
    %2418 = vmatprep.mubr.f32.mxu0 0.0
    %2419 = vmatmul.mubr.f32.gmra.mxu0 %v99
    %v2420 = vpop.f32.mrf.mxu0
    %v2421 = vadd.f32 0.0, %v2420
    %v2422 = vpop.f32.mrf.mxu0
    %2423 = vmatprep.mubr.f32.mxu0 0.0
    %2424 = vmatmul.mubr.f32.gmra.mxu0 %v100
    %v2425 = vpop.f32.mrf.mxu0
    %v2426 = vadd.f32 0.0, %v2425
    %v2427 = vpop.f32.mrf.mxu0
    %2428 = vmatprep.mubr.f32.mxu0 0.0
    %2429 = vmatmul.mubr.f32.gmra.mxu0 %v101
    %v2430 = vpop.f32.mrf.mxu0
    %v2431 = vadd.f32 0.0, %v2430
    %v2432 = vpop.f32.mrf.mxu0
    %2433 = vmatprep.mubr.f32.mxu0 0.0
    %2434 = vmatmul.mubr.f32.gmra.mxu0 %v102
    %v2435 = vpop.f32.mrf.mxu0
    %v2436 = vadd.f32 0.0, %v2435
    %v2437 = vpop.f32.mrf.mxu0
    %2438 = vmatprep.mubr.f32.mxu0 0.0
    %2439 = vmatmul.mubr.f32.gmra.mxu0 %v103
    %v2440 = vpop.f32.mrf.mxu0
    %v2441 = vadd.f32 0.0, %v2440
    %v2442 = vpop.f32.mrf.mxu0
    %2443 = vmatprep.mubr.f32.mxu0 0.0
    %2444 = vmatmul.mubr.f32.gmra.mxu0 %v104
    %v2445 = vpop.f32.mrf.mxu0
    %v2446 = vadd.f32 0.0, %v2445
    %v2447 = vpop.f32.mrf.mxu0
    %2448 = vmatprep.mubr.f32.mxu0 0.0
    %2449 = vmatmul.mubr.f32.gmra.mxu0 %v105
    %v2450 = vpop.f32.mrf.mxu0
    %v2451 = vadd.f32 0.0, %v2450
    %v2452 = vpop.f32.mrf.mxu0
    %2453 = vmatprep.mubr.f32.mxu0 0.0
    %2454 = vmatmul.mubr.f32.gmra.mxu0 %v106
    %v2455 = vpop.f32.mrf.mxu0
    %v2456 = vadd.f32 0.0, %v2455
    %v2457 = vpop.f32.mrf.mxu0
    %2458 = vmatprep.mubr.f32.mxu0 0.0
    %2459 = vmatmul.mubr.f32.gmra.mxu0 %v107
    %v2460 = vpop.f32.mrf.mxu0
    %v2461 = vadd.f32 0.0, %v2460
    %v2462 = vpop.f32.mrf.mxu0
    %2463 = vmatprep.mubr.f32.mxu0 0.0
    %2464 = vmatmul.mubr.f32.gmra.mxu0 %v108
    %v2465 = vpop.f32.mrf.mxu0
    %v2466 = vadd.f32 0.0, %v2465
    %v2467 = vpop.f32.mrf.mxu0
    %2468 = vmatprep.mubr.f32.mxu0 0.0
    %2469 = vmatmul.mubr.f32.gmra.mxu0 %v109
    %v2470 = vpop.f32.mrf.mxu0
    %v2471 = vadd.f32 0.0, %v2470
    %v2472 = vpop.f32.mrf.mxu0
    %2473 = vmatprep.mubr.f32.mxu0 0.0
    %2474 = vmatmul.mubr.f32.gmra.mxu0 %v110
    %v2475 = vpop.f32.mrf.mxu0
    %v2476 = vadd.f32 0.0, %v2475
    %v2477 = vpop.f32.mrf.mxu0
    %2478 = vmatprep.mubr.f32.mxu0 0.0
    %2479 = vmatmul.mubr.f32.gmra.mxu0 %v111
    %v2480 = vpop.f32.mrf.mxu0
    %v2481 = vadd.f32 0.0, %v2480
    %v2482 = vpop.f32.mrf.mxu0
    %2483 = vmatprep.mubr.f32.mxu0 0.0
    %2484 = vmatmul.mubr.f32.gmra.mxu0 %v112
    %v2485 = vpop.f32.mrf.mxu0
    %v2486 = vadd.f32 0.0, %v2485
    %v2487 = vpop.f32.mrf.mxu0
    %2488 = vdwg.mxu0
    %2505 = vrot.lane.b32.xlu0 %v2411, 32
    %v2506 = vpop.permute.xlu0 %2505
    %2507 = vrot.lane.b32.xlu0 %v2416, 32
    %v2508 = vpop.permute.xlu0 %2507
    %2509 = vrot.lane.b32.xlu0 %v2421, 32
    %v2510 = vpop.permute.xlu0 %2509
    %2511 = vrot.lane.b32.xlu0 %v2426, 32
    %v2512 = vpop.permute.xlu0 %2511
    %2513 = vrot.lane.b32.xlu0 %v2431, 32
    %v2514 = vpop.permute.xlu0 %2513
    %2515 = vrot.lane.b32.xlu0 %v2436, 32
    %v2516 = vpop.permute.xlu0 %2515
    %2517 = vrot.lane.b32.xlu0 %v2441, 32
    %v2518 = vpop.permute.xlu0 %2517
    %2519 = vrot.lane.b32.xlu0 %v2446, 32
    %v2520 = vpop.permute.xlu0 %2519
    %2521 = vrot.lane.b32.xlu0 %v2451, 32
    %v2522 = vpop.permute.xlu0 %2521
    %2523 = vrot.lane.b32.xlu0 %v2456, 32
    %v2524 = vpop.permute.xlu0 %2523
    %2525 = vrot.lane.b32.xlu0 %v2461, 32
    %v2526 = vpop.permute.xlu0 %2525
    %2527 = vrot.lane.b32.xlu0 %v2466, 32
    %v2528 = vpop.permute.xlu0 %2527
    %2529 = vrot.lane.b32.xlu0 %v2471, 32
    %v2530 = vpop.permute.xlu0 %2529
    %2531 = vrot.lane.b32.xlu0 %v2476, 32
    %v2532 = vpop.permute.xlu0 %2531
    %2533 = vrot.lane.b32.xlu0 %v2481, 32
    %v2534 = vpop.permute.xlu0 %2533
    %2535 = vrot.lane.b32.xlu0 %v2486, 32
    %v2536 = vpop.permute.xlu0 %2535
    %v2553 = vsel %vm1680, %v2319, %v2506
    %v2554 = vsel %vm1680, %v2320, %v2508
    %v2555 = vsel %vm1680, %v2321, %v2510
    %v2556 = vsel %vm1680, %v2322, %v2512
    %v2557 = vsel %vm1680, %v2323, %v2514
    %v2558 = vsel %vm1680, %v2324, %v2516
    %v2559 = vsel %vm1680, %v2325, %v2518
    %v2560 = vsel %vm1680, %v2326, %v2520
    %v2561 = vsel %vm1680, %v2327, %v2522
    %v2562 = vsel %vm1680, %v2328, %v2524
    %v2563 = vsel %vm1680, %v2329, %v2526
    %v2564 = vsel %vm1680, %v2330, %v2528
    %v2565 = vsel %vm1680, %v2331, %v2530
    %v2566 = vsel %vm1680, %v2332, %v2532
    %v2567 = vsel %vm1680, %v2333, %v2534
    %v2568 = vsel %vm1680, %v2334, %v2536
    %v2570 = vlaneseq
    %v2571 = vshrl.u32 %v2570, 7
    %v2572 = vsub.s32 0, %v2571
    %v2573 = vrot.slane %v2343, %v2572
    %vm2575 = vcmask 523264
    %v2577 = vsel %vm2575, %v2553, 0
    %v2580 = vsel %vm2575, %v2554, 0
    %v2583 = vsel %vm2575, %v2555, 0
    %v2586 = vsel %vm2575, %v2556, 0
    %v2589 = vsel %vm2575, %v2557, 0
    %v2592 = vsel %vm2575, %v2558, 0
    %v2595 = vsel %vm2575, %v2559, 0
    %v2598 = vsel %vm2575, %v2560, 0
    %v2601 = vsel %vm2575, %v2561, 0
    %v2604 = vsel %vm2575, %v2562, 0
    %v2607 = vsel %vm2575, %v2563, 0
    %v2610 = vsel %vm2575, %v2564, 0
    %v2613 = vsel %vm2575, %v2565, 0
    %v2616 = vsel %vm2575, %v2566, 0
    %v2619 = vsel %vm2575, %v2567, 0
    %v2622 = vsel %vm2575, %v2568, 0
    %2624 = vmatprep.subr.mxu0 0.0
    %2625 = vmatpush1.msra.mxu0 0.0
    %2626 = vmatprep.subr.mxu0 0.0
    %2627 = vmatpush1.msra.mxu0 0.0
    %2628 = vmatprep.subr.mxu0 0.0
    %2629 = vmatpush1.msra.mxu0 0.0
    %2630 = vmatprep.subr.mxu0 0.0
    %2631 = vmatpush1.msra.mxu0 0.0
    %2632 = vmatprep.subr.mxu0 0.0
    %2633 = vmatpush1.msra.mxu0 0.0
    %2634 = vmatprep.subr.mxu0 0.0
    %2635 = vmatpush1.msra.mxu0 0.0
    %2636 = vmatprep.subr.mxu0 0.0
    %2637 = vmatpush1.msra.mxu0 0.0
    %2638 = vmatprep.subr.mxu0 0.0
    %2639 = vmatpush1.msra.mxu0 0.0
    %2640 = vmatprep.subr.mxu0 0.0
    %2641 = vmatpush1.msra.mxu0 %v2342
    %2642 = vmatprep.subr.mxu0 0.0
    %2643 = vmatpush1.msra.mxu0 %v2341
    %2644 = vmatprep.subr.mxu0 0.0
    %2645 = vmatpush1.msra.mxu0 %v2340
    %2646 = vmatprep.subr.mxu0 0.0
    %2647 = vmatpush1.msra.mxu0 %v2339
    %2648 = vmatprep.subr.mxu0 0.0
    %2649 = vmatpush1.msra.mxu0 %v2338
    %2650 = vmatprep.subr.mxu0 0.0
    %2651 = vmatpush1.msra.mxu0 %v2337
    %2652 = vmatprep.subr.mxu0 0.0
    %2653 = vmatpush1.msra.mxu0 %v2336
    %2654 = vmatprep.subr.mxu0 0.0
    %2655 = vmatpush1.msra.mxu0 %v2335
    %2656 = vmatprep.subr.mxu0 0.0
    %2657 = vmatpush2.msra.mxu0 0.0
    %2658 = vmatprep.subr.mxu0 0.0
    %2659 = vmatpush2.msra.mxu0 0.0
    %2660 = vmatprep.subr.mxu0 0.0
    %2661 = vmatpush2.msra.mxu0 0.0
    %2662 = vmatprep.subr.mxu0 0.0
    %2663 = vmatpush2.msra.mxu0 0.0
    %2664 = vmatprep.subr.mxu0 0.0
    %2665 = vmatpush2.msra.mxu0 0.0
    %2666 = vmatprep.subr.mxu0 0.0
    %2667 = vmatpush2.msra.mxu0 0.0
    %2668 = vmatprep.subr.mxu0 0.0
    %2669 = vmatpush2.msra.mxu0 0.0
    %2670 = vmatprep.subr.mxu0 0.0
    %2671 = vmatpush2.msra.mxu0 0.0
    %2672 = vmatprep.subr.mxu0 0.0
    %2673 = vmatpush2.msra.mxu0 0.0
    %2674 = vmatprep.subr.mxu0 0.0
    %2675 = vmatpush2.msra.mxu0 0.0
    %2676 = vmatprep.subr.mxu0 0.0
    %2677 = vmatpush2.msra.mxu0 0.0
    %2678 = vmatprep.subr.mxu0 0.0
    %2679 = vmatpush2.msra.mxu0 0.0
    %2680 = vmatprep.subr.mxu0 0.0
    %2681 = vmatpush2.msra.mxu0 0.0
    %2682 = vmatprep.subr.mxu0 0.0
    %2683 = vmatpush2.msra.mxu0 0.0
    %2684 = vmatprep.subr.mxu0 0.0
    %2685 = vmatpush2.msra.mxu0 0.0
    %2686 = vmatprep.subr.mxu0 0.0
    %2687 = vmatpush2.msra.mxu0 0.0
    %2688 = vmatprep.mubr.f32.mxu0 0.0
    %2689 = vmatmul.mubr.f32.gmra.mxu0 %v2577
    %v2690 = vpop.f32.mrf.mxu0
    %v2691 = vadd.f32 %v2573, %v2690
    %v2692 = vpop.f32.mrf.mxu0
    %2693 = vmatprep.mubr.f32.mxu0 0.0
    %2694 = vmatmul.mubr.f32.gmra.mxu0 %v2580
    %v2695 = vpop.f32.mrf.mxu0
    %v2696 = vadd.f32 %v2573, %v2695
    %v2697 = vpop.f32.mrf.mxu0
    %2698 = vmatprep.mubr.f32.mxu0 0.0
    %2699 = vmatmul.mubr.f32.gmra.mxu0 %v2583
    %v2700 = vpop.f32.mrf.mxu0
    %v2701 = vadd.f32 %v2573, %v2700
    %v2702 = vpop.f32.mrf.mxu0
    %2703 = vmatprep.mubr.f32.mxu0 0.0
    %2704 = vmatmul.mubr.f32.gmra.mxu0 %v2586
    %v2705 = vpop.f32.mrf.mxu0
    %v2706 = vadd.f32 %v2573, %v2705
    %v2707 = vpop.f32.mrf.mxu0
    %2708 = vmatprep.mubr.f32.mxu0 0.0
    %2709 = vmatmul.mubr.f32.gmra.mxu0 %v2589
    %v2710 = vpop.f32.mrf.mxu0
    %v2711 = vadd.f32 %v2573, %v2710
    %v2712 = vpop.f32.mrf.mxu0
    %2713 = vmatprep.mubr.f32.mxu0 0.0
    %2714 = vmatmul.mubr.f32.gmra.mxu0 %v2592
    %v2715 = vpop.f32.mrf.mxu0
    %v2716 = vadd.f32 %v2573, %v2715
    %v2717 = vpop.f32.mrf.mxu0
    %2718 = vmatprep.mubr.f32.mxu0 0.0
    %2719 = vmatmul.mubr.f32.gmra.mxu0 %v2595
    %v2720 = vpop.f32.mrf.mxu0
    %v2721 = vadd.f32 %v2573, %v2720
    %v2722 = vpop.f32.mrf.mxu0
    %2723 = vmatprep.mubr.f32.mxu0 0.0
    %2724 = vmatmul.mubr.f32.gmra.mxu0 %v2598
    %v2725 = vpop.f32.mrf.mxu0
    %v2726 = vadd.f32 %v2573, %v2725
    %v2727 = vpop.f32.mrf.mxu0
    %2728 = vmatprep.mubr.f32.mxu0 0.0
    %2729 = vmatmul.mubr.f32.gmra.mxu0 %v2601
    %v2730 = vpop.f32.mrf.mxu0
    %v2731 = vadd.f32 %v2573, %v2730
    %v2732 = vpop.f32.mrf.mxu0
    %2733 = vmatprep.mubr.f32.mxu0 0.0
    %2734 = vmatmul.mubr.f32.gmra.mxu0 %v2604
    %v2735 = vpop.f32.mrf.mxu0
    %v2736 = vadd.f32 %v2573, %v2735
    %v2737 = vpop.f32.mrf.mxu0
    %2738 = vmatprep.mubr.f32.mxu0 0.0
    %2739 = vmatmul.mubr.f32.gmra.mxu0 %v2607
    %v2740 = vpop.f32.mrf.mxu0
    %v2741 = vadd.f32 %v2573, %v2740
    %v2742 = vpop.f32.mrf.mxu0
    %2743 = vmatprep.mubr.f32.mxu0 0.0
    %2744 = vmatmul.mubr.f32.gmra.mxu0 %v2610
    %v2745 = vpop.f32.mrf.mxu0
    %v2746 = vadd.f32 %v2573, %v2745
    %v2747 = vpop.f32.mrf.mxu0
    %2748 = vmatprep.mubr.f32.mxu0 0.0
    %2749 = vmatmul.mubr.f32.gmra.mxu0 %v2613
    %v2750 = vpop.f32.mrf.mxu0
    %v2751 = vadd.f32 %v2573, %v2750
    %v2752 = vpop.f32.mrf.mxu0
    %2753 = vmatprep.mubr.f32.mxu0 0.0
    %2754 = vmatmul.mubr.f32.gmra.mxu0 %v2616
    %v2755 = vpop.f32.mrf.mxu0
    %v2756 = vadd.f32 %v2573, %v2755
    %v2757 = vpop.f32.mrf.mxu0
    %2758 = vmatprep.mubr.f32.mxu0 0.0
    %2759 = vmatmul.mubr.f32.gmra.mxu0 %v2619
    %v2760 = vpop.f32.mrf.mxu0
    %v2761 = vadd.f32 %v2573, %v2760
    %v2762 = vpop.f32.mrf.mxu0
    %2763 = vmatprep.mubr.f32.mxu0 0.0
    %2764 = vmatmul.mubr.f32.gmra.mxu0 %v2622
    %v2765 = vpop.f32.mrf.mxu0
    %v2766 = vadd.f32 %v2573, %v2765
    %v2767 = vpop.f32.mrf.mxu0
    %2768 = vdwg.mxu0
    %v2769 = vmax.f32 %v2691, 0.0
    %v2770 = vmax.f32 %v2696, 0.0
    %v2771 = vmax.f32 %v2701, 0.0
    %v2772 = vmax.f32 %v2706, 0.0
    %v2773 = vmax.f32 %v2711, 0.0
    %v2774 = vmax.f32 %v2716, 0.0
    %v2775 = vmax.f32 %v2721, 0.0
    %v2776 = vmax.f32 %v2726, 0.0
    %v2777 = vmax.f32 %v2731, 0.0
    %v2778 = vmax.f32 %v2736, 0.0
    %v2779 = vmax.f32 %v2741, 0.0
    %v2780 = vmax.f32 %v2746, 0.0
    %v2781 = vmax.f32 %v2751, 0.0
    %v2782 = vmax.f32 %v2756, 0.0
    %v2783 = vmax.f32 %v2761, 0.0
    %v2784 = vmax.f32 %v2766, 0.0
    %v2785 = vld [vmem:[%s2] sm:$0xf]
    %2786 = vmatprep.subr.mxu0 0.0
    %2787 = vmatpush1.msra.mxu0 %v2784
    %2788 = vmatprep.subr.mxu0 0.0
    %2789 = vmatpush1.msra.mxu0 %v2783
    %2790 = vmatprep.subr.mxu0 0.0
    %2791 = vmatpush1.msra.mxu0 %v2782
    %2792 = vmatprep.subr.mxu0 0.0
    %2793 = vmatpush1.msra.mxu0 %v2781
    %2794 = vmatprep.subr.mxu0 0.0
    %2795 = vmatpush1.msra.mxu0 %v2780
    %2796 = vmatprep.subr.mxu0 0.0
    %2797 = vmatpush1.msra.mxu0 %v2779
    %2798 = vmatprep.subr.mxu0 0.0
    %2799 = vmatpush1.msra.mxu0 %v2778
    %2800 = vmatprep.subr.mxu0 0.0
    %2801 = vmatpush1.msra.mxu0 %v2777
    %2802 = vmatprep.subr.mxu0 0.0
    %2803 = vmatpush1.msra.mxu0 %v2776
    %2804 = vmatprep.subr.mxu0 0.0
    %2805 = vmatpush1.msra.mxu0 %v2775
    %2806 = vmatprep.subr.mxu0 0.0
    %2807 = vmatpush1.msra.mxu0 %v2774
    %2808 = vmatprep.subr.mxu0 0.0
    %2809 = vmatpush1.msra.mxu0 %v2773
    %2810 = vmatprep.subr.mxu0 0.0
    %2811 = vmatpush1.msra.mxu0 %v2772
    %2812 = vmatprep.subr.mxu0 0.0
    %2813 = vmatpush1.msra.mxu0 %v2771
    %2814 = vmatprep.subr.mxu0 0.0
    %2815 = vmatpush1.msra.mxu0 %v2770
    %2816 = vmatprep.subr.mxu0 0.0
    %2817 = vmatpush1.msra.mxu0 %v2769
    %2818 = vmatprep.subr.mxu0 0.0
    %2819 = vmatpush2.msra.mxu0 0.0
    %2820 = vmatprep.subr.mxu0 0.0
    %2821 = vmatpush2.msra.mxu0 0.0
    %2822 = vmatprep.subr.mxu0 0.0
    %2823 = vmatpush2.msra.mxu0 0.0
    %2824 = vmatprep.subr.mxu0 0.0
    %2825 = vmatpush2.msra.mxu0 0.0
    %2826 = vmatprep.subr.mxu0 0.0
    %2827 = vmatpush2.msra.mxu0 0.0
    %2828 = vmatprep.subr.mxu0 0.0
    %2829 = vmatpush2.msra.mxu0 0.0
    %2830 = vmatprep.subr.mxu0 0.0
    %2831 = vmatpush2.msra.mxu0 0.0
    %2832 = vmatprep.subr.mxu0 0.0
    %2833 = vmatpush2.msra.mxu0 0.0
    %2834 = vmatprep.subr.mxu0 0.0
    %2835 = vmatpush2.msra.mxu0 0.0
    %2836 = vmatprep.subr.mxu0 0.0
    %2837 = vmatpush2.msra.mxu0 0.0
    %2838 = vmatprep.subr.mxu0 0.0
    %2839 = vmatpush2.msra.mxu0 0.0
    %2840 = vmatprep.subr.mxu0 0.0
    %2841 = vmatpush2.msra.mxu0 0.0
    %2842 = vmatprep.subr.mxu0 0.0
    %2843 = vmatpush2.msra.mxu0 0.0
    %2844 = vmatprep.subr.mxu0 0.0
    %2845 = vmatpush2.msra.mxu0 0.0
    %2846 = vmatprep.subr.mxu0 0.0
    %2847 = vmatpush2.msra.mxu0 0.0
    %2848 = vmatprep.subr.mxu0 0.0
    %2849 = vmatpush2.msra.mxu0 0.0
    %2850 = vmatprep.mubr.f32.mxu0 0.0
    %2851 = vmatmul.mubr.f32.gmra.mxu0 %v2785
    %v2852 = vpop.f32.mrf.mxu0
    %v2853 = vadd.f32 0.0, %v2852
    %v2854 = vpop.f32.mrf.mxu0
    %2855 = vdwg.mxu0
    %v2856 = vld [vmem:[%s15] sm:$0xff]
    %v2857 = vld [vmem:[%s15 + $0x8] sm:$0xff]
    %v2858 = vld [vmem:[%s15 + $0x10] sm:$0xff]
    %v2859 = vld [vmem:[%s15 + $0x18] sm:$0xff]
    %v2860 = vld [vmem:[%s16] sm:$0x1]
    %v2862 = vlaneseq
    %v2863 = vshrl.u32 %v2862, 7
    %v2864 = vsub.s32 0, %v2863
    %v2865 = vrot.slane %v2860, %v2864
    %v2868 = vsel %vm1680, %v2853, 0
    %2870 = vmatprep.subr.mxu0 0.0
    %2871 = vmatpush1.msra.mxu0 0.0
    %2872 = vmatprep.subr.mxu0 0.0
    %2873 = vmatpush1.msra.mxu0 0.0
    %2874 = vmatprep.subr.mxu0 0.0
    %2875 = vmatpush1.msra.mxu0 0.0
    %2876 = vmatprep.subr.mxu0 0.0
    %2877 = vmatpush1.msra.mxu0 0.0
    %2878 = vmatprep.subr.mxu0 0.0
    %2879 = vmatpush1.msra.mxu0 0.0
    %2880 = vmatprep.subr.mxu0 0.0
    %2881 = vmatpush1.msra.mxu0 0.0
    %2882 = vmatprep.subr.mxu0 0.0
    %2883 = vmatpush1.msra.mxu0 0.0
    %2884 = vmatprep.subr.mxu0 0.0
    %2885 = vmatpush1.msra.mxu0 0.0
    %2886 = vmatprep.subr.mxu0 0.0
    %2887 = vmatpush1.msra.mxu0 0.0
    %2888 = vmatprep.subr.mxu0 0.0
    %2889 = vmatpush1.msra.mxu0 0.0
    %2890 = vmatprep.subr.mxu0 0.0
    %2891 = vmatpush1.msra.mxu0 0.0
    %2892 = vmatprep.subr.mxu0 0.0
    %2893 = vmatpush1.msra.mxu0 0.0
    %2894 = vmatprep.subr.mxu0 0.0
    %2895 = vmatpush1.msra.mxu0 %v2859
    %2896 = vmatprep.subr.mxu0 0.0
    %2897 = vmatpush1.msra.mxu0 %v2858
    %2898 = vmatprep.subr.mxu0 0.0
    %2899 = vmatpush1.msra.mxu0 %v2857
    %2900 = vmatprep.subr.mxu0 0.0
    %2901 = vmatpush1.msra.mxu0 %v2856
    %2902 = vmatprep.subr.mxu0 0.0
    %2903 = vmatpush2.msra.mxu0 0.0
    %2904 = vmatprep.subr.mxu0 0.0
    %2905 = vmatpush2.msra.mxu0 0.0
    %2906 = vmatprep.subr.mxu0 0.0
    %2907 = vmatpush2.msra.mxu0 0.0
    %2908 = vmatprep.subr.mxu0 0.0
    %2909 = vmatpush2.msra.mxu0 0.0
    %2910 = vmatprep.subr.mxu0 0.0
    %2911 = vmatpush2.msra.mxu0 0.0
    %2912 = vmatprep.subr.mxu0 0.0
    %2913 = vmatpush2.msra.mxu0 0.0
    %2914 = vmatprep.subr.mxu0 0.0
    %2915 = vmatpush2.msra.mxu0 0.0
    %2916 = vmatprep.subr.mxu0 0.0
    %2917 = vmatpush2.msra.mxu0 0.0
    %2918 = vmatprep.subr.mxu0 0.0
    %2919 = vmatpush2.msra.mxu0 0.0
    %2920 = vmatprep.subr.mxu0 0.0
    %2921 = vmatpush2.msra.mxu0 0.0
    %2922 = vmatprep.subr.mxu0 0.0
    %2923 = vmatpush2.msra.mxu0 0.0
    %2924 = vmatprep.subr.mxu0 0.0
    %2925 = vmatpush2.msra.mxu0 0.0
    %2926 = vmatprep.subr.mxu0 0.0
    %2927 = vmatpush2.msra.mxu0 0.0
    %2928 = vmatprep.subr.mxu0 0.0
    %2929 = vmatpush2.msra.mxu0 0.0
    %2930 = vmatprep.subr.mxu0 0.0
    %2931 = vmatpush2.msra.mxu0 0.0
    %2932 = vmatprep.subr.mxu0 0.0
    %2933 = vmatpush2.msra.mxu0 0.0
    %2934 = vmatprep.mubr.f32.mxu0 0.0
    %2935 = vmatmul.mubr.f32.gmra.mxu0 %v2868
    %v2936 = vpop.f32.mrf.mxu0
    %v2937 = vadd.f32 %v2865, %v2936
    %v2938 = vpop.f32.mrf.mxu0
    %2939 = vdwg.mxu0
    %v2940 = vmax.f32 %v2937, 0.0
    %v2941 = vld [vmem:[%s17] sm:$0x1]
    %v2942 = vld [vmem:[#allocation2] sm:$0x1]
    %2944 = vset.pattern.permute.xlu0 0
    %2945 = vperm.xlu0 %2944, %v2942
    %v2946 = vpop.permute.xlu0 %2945
    %v2948 = vlaneseq
    %v2949 = vshrl.u32 %v2948, 7
    %v2950 = vsub.s32 0, %v2949
    %v2951 = vrot.slane %v2946, %v2950
    %v2953 = vsel %vm1680, %v2941, 0
    %v2956 = vsel %vm1680, %v2940, 0
    %2958 = vmatprep.subr.mxu0 0.0
    %2959 = vmatpush1.xpose.msra.mxu0 0.0
    %2960 = vmatprep.subr.mxu0 0.0
    %2961 = vmatpush1.xpose.msra.mxu0 0.0
    %2962 = vmatprep.subr.mxu0 0.0
    %2963 = vmatpush1.xpose.msra.mxu0 0.0
    %2964 = vmatprep.subr.mxu0 0.0
    %2965 = vmatpush1.xpose.msra.mxu0 0.0
    %2966 = vmatprep.subr.mxu0 0.0
    %2967 = vmatpush1.xpose.msra.mxu0 0.0
    %2968 = vmatprep.subr.mxu0 0.0
    %2969 = vmatpush1.xpose.msra.mxu0 0.0
    %2970 = vmatprep.subr.mxu0 0.0
    %2971 = vmatpush1.xpose.msra.mxu0 0.0
    %2972 = vmatprep.subr.mxu0 0.0
    %2973 = vmatpush1.xpose.msra.mxu0 0.0
    %2974 = vmatprep.subr.mxu0 0.0
    %2975 = vmatpush1.xpose.msra.mxu0 0.0
    %2976 = vmatprep.subr.mxu0 0.0
    %2977 = vmatpush1.xpose.msra.mxu0 0.0
    %2978 = vmatprep.subr.mxu0 0.0
    %2979 = vmatpush1.xpose.msra.mxu0 0.0
    %2980 = vmatprep.subr.mxu0 0.0
    %2981 = vmatpush1.xpose.msra.mxu0 0.0
    %2982 = vmatprep.subr.mxu0 0.0
    %2983 = vmatpush1.xpose.msra.mxu0 0.0
    %2984 = vmatprep.subr.mxu0 0.0
    %2985 = vmatpush1.xpose.msra.mxu0 0.0
    %2986 = vmatprep.subr.mxu0 0.0
    %2987 = vmatpush1.xpose.msra.mxu0 0.0
    %2988 = vmatprep.subr.mxu0 0.0
    %2989 = vmatpush1.xpose.msra.mxu0 %v2956
    %2990 = vmatprep.subr.mxu0 0.0
    %2991 = vmatpush2.xpose.msra.mxu0 0.0
    %2992 = vmatprep.subr.mxu0 0.0
    %2993 = vmatpush2.xpose.msra.mxu0 0.0
    %2994 = vmatprep.subr.mxu0 0.0
    %2995 = vmatpush2.xpose.msra.mxu0 0.0
    %2996 = vmatprep.subr.mxu0 0.0
    %2997 = vmatpush2.xpose.msra.mxu0 0.0
    %2998 = vmatprep.subr.mxu0 0.0
    %2999 = vmatpush2.xpose.msra.mxu0 0.0
    %3000 = vmatprep.subr.mxu0 0.0
    %3001 = vmatpush2.xpose.msra.mxu0 0.0
    %3002 = vmatprep.subr.mxu0 0.0
    %3003 = vmatpush2.xpose.msra.mxu0 0.0
    %3004 = vmatprep.subr.mxu0 0.0
    %3005 = vmatpush2.xpose.msra.mxu0 0.0
    %3006 = vmatprep.subr.mxu0 0.0
    %3007 = vmatpush2.xpose.msra.mxu0 0.0
    %3008 = vmatprep.subr.mxu0 0.0
    %3009 = vmatpush2.xpose.msra.mxu0 0.0
    %3010 = vmatprep.subr.mxu0 0.0
    %3011 = vmatpush2.xpose.msra.mxu0 0.0
    %3012 = vmatprep.subr.mxu0 0.0
    %3013 = vmatpush2.xpose.msra.mxu0 0.0
    %3014 = vmatprep.subr.mxu0 0.0
    %3015 = vmatpush2.xpose.msra.mxu0 0.0
    %3016 = vmatprep.subr.mxu0 0.0
    %3017 = vmatpush2.xpose.msra.mxu0 0.0
    %3018 = vmatprep.subr.mxu0 0.0
    %3019 = vmatpush2.xpose.msra.mxu0 0.0
    %3020 = vmatprep.subr.mxu0 0.0
    %3021 = vmatpush2.xpose.msra.mxu0 0.0
    %3022 = vmatprep.mubr.f32.mxu0 0.0
    %3023 = vmatmul.mubr.f32.gmra.mxu0 %v2953
    %v3024 = vpop.f32.mrf.mxu0
    %v3025 = vadd.f32 %v2951, %v3024
    %v3026 = vpop.f32.mrf.mxu0
    %3027 = vdwg.mxu0
    %vm3028 = vcmask 24576
    %3029 = vst.msk [vmem:[#allocation3] sm:$0x1] %vm3028, %v3025
    // Predicated region
    $region78: #{gcn_forward.1} parent=1 // pred_check
      _
    $region79: #{gcn_forward.1} parent=1 // pred_check_branch
      %3031 = sbr.rel (0) target = $region81
    $region80: #{gcn_forward.1} parent=1 // pred_region
      %s3033 = ssub.s32 16, 16
      %3034 = vsyncadd [#allocation4], %s3033
      %s3036 = sshll.u32 [#allocation3], 4
      %s3037 = int_to_ptr.vmem [resolvable:$true] %s3036
      %3039 = dma.vmem_to_hbm [thread:$0]  %s3037, 16, %s19, [#allocation4]
    $region81: #{gcn_forward.1} parent=1 // pred_fallthru
      _
    // Predicated region
    $region82: #{gcn_forward.1} parent=1 // pred_check
      _
    $region83: #{gcn_forward.1} parent=1 // pred_check_branch
      %3041 = sbr.rel (0) target = $region85
    $region84: #{gcn_forward.1} parent=1 // pred_region
      %3042 = dma.done [#allocation4], 16
    $region85: #{gcn_forward.1} parent=1 // pred_fallthru
      _
    %3043 = vsyncpa [#allocation4], 1

</llo_original>
